<compile_context>
chip_gen: v7x
topology: tpu7x:2x2x1
jax: 0.10.0
libtpu: 0.0.40
codegen_flags: <defaults>
</compile_context>

<pallas_src>
import functools
import math

import jax
import jax.numpy as jnp
from jax.experimental import pallas as pl
from jax.experimental.pallas import tpu as pltpu


def _lstm_decoder_kernel(num_layers, ph, hidden_dim, z_ref, *refs):
    """refs = [w_ih0, w_hh0, b0, ..., w_ih_{L-1}, w_hh_{L-1}, b_{L-1},
               w_blk, b_blk, out_ref, htop_scratch]"""
    H = hidden_dim
    n_layer_refs = 3 * num_layers
    w_blk_ref = refs[n_layer_refs]          # (ph*H, ph*out) block-diagonal head (load deferred)
    b_blk_ref = refs[n_layer_refs + 1]      # (1, ph*out)
    out_ref = refs[n_layer_refs + 2]
    htop = refs[n_layer_refs + 3]           # VMEM scratch (B, ph*H)

    # LSTM weights: time-invariant, live across the whole unrolled recurrence.
    w_ih0 = refs[0][...]                    # (latent, 4H)
    w_hh0 = refs[1][...]                    # (H, 4H)
    b0 = refs[2][...]                       # (1, 4H)
    layer_w = []
    for l in range(1, num_layers):
        layer_w.append((refs[3 * l][...],       # w_ih_l (H, 4H)
                        refs[3 * l + 1][...],   # w_hh_l (H, 4H)
                        refs[3 * l + 2][...]))  # b_l    (1, 4H)

    z = z_ref[...].astype(jnp.float32)      # (B, latent) — same input every timestep
    B = z.shape[0]

    # Hoisted, time-invariant layer-0 input projection (removes ph-1 matmuls + bias
    # adds from the serial dependency chain).
    z_proj = jnp.dot(z, w_ih0, preferred_element_type=jnp.float32) + b0   # (B, 4H)

    # Hoisted per-gate lane scale: sigmoid(x) = 0.5*tanh(x/2) + 0.5, so scale the
    # i/f/o blocks by 0.5 and leave the g block at 1.0 -> one tanh covers all gates.
    lane = jax.lax.broadcasted_iota(jnp.int32, (B, 4 * H), 1)
    gate_scale = jnp.where((lane >= 2 * H) & (lane < 3 * H),
                           jnp.float32(1.0), jnp.float32(0.5))            # (B, 4H)

    h = [jnp.zeros((B, H), jnp.float32) for _ in range(num_layers)]
    c = [jnp.zeros((B, H), jnp.float32) for _ in range(num_layers)]

    def gate_update(gates, c_prev):
        # Single EUP push for all four gates (PyTorch gate order i, f, g, o), plus
        # tanh(c_new): 2 transcendentals per layer-step instead of 3-4.
        t = jnp.tanh(gates * gate_scale)
        u = 0.5 * t + 0.5                   # sigmoid(gates) on the i/f/o lanes
        i_g = u[:, 0 * H:1 * H]
        f_g = u[:, 1 * H:2 * H]
        g_g = t[:, 2 * H:3 * H]
        o_g = u[:, 3 * H:4 * H]
        c_new = f_g * c_prev + i_g * g_g
        h_new = o_g * jnp.tanh(c_new)
        return h_new, c_new

    # ph and num_layers are static -> fully unrolled; LLO sees the whole recurrence.
    for t_step in range(ph):
        # Layer 0: only the recurrent matmul remains in-loop.
        gates0 = z_proj + jnp.dot(h[0], w_hh0, preferred_element_type=jnp.float32)
        h[0], c[0] = gate_update(gates0, c[0])
        x_t = h[0]
        # Layers >= 1: un-fused dots. h[l] is the previous timestep's state, so its
        # recurrent dot can be issued early and overlap with layer-0 compute.
        for l in range(1, num_layers):
            w_ih_l, w_hh_l, b_l = layer_w[l - 1]
            rec = jnp.dot(h[l], w_hh_l, preferred_element_type=jnp.float32) + b_l
            gates = rec + jnp.dot(x_t, w_ih_l, preferred_element_type=jnp.float32)
            h[l], c[l] = gate_update(gates, c[l])
            x_t = h[l]
        # Lane-offset store of the top-layer state; hides under the next step's matmuls
        # and keeps only short live ranges in vregs.
        htop[:, t_step * H:(t_step + 1) * H] = x_t

    # Deferred dense head: load the (ph*H, ph*out) weights only now (keeps ~32 vregs
    # free during the recurrence), one block-diagonal matmul over all timesteps, one
    # lane-dense batch-first store.
    h_all = htop[...]                                                     # (B, ph*H)
    w_blk = w_blk_ref[...]
    b_blk = b_blk_ref[...]
    y = jnp.dot(h_all, w_blk, preferred_element_type=jnp.float32) + b_blk  # (B, ph*out)
    out_ref[...] = y.astype(out_ref.dtype)


def init_decoder_params(key, latent_dim, hidden_dim, output_dim, num_layers, ph):
    """Deterministic synthetic parameters with PyTorch-like uniform init ranges."""
    params = {"latent_dim": latent_dim, "hidden_dim": hidden_dim,
              "output_dim": output_dim, "num_layers": num_layers, "ph": ph,
              "layers": []}
    k_lstm = 1.0 / math.sqrt(hidden_dim)
    for l in range(num_layers):
        in_dim = latent_dim if l == 0 else hidden_dim
        key, k1, k2, k3, k4 = jax.random.split(key, 5)
        w_ih = jax.random.uniform(k1, (in_dim, 4 * hidden_dim), jnp.float32, -k_lstm, k_lstm)
        w_hh = jax.random.uniform(k2, (hidden_dim, 4 * hidden_dim), jnp.float32, -k_lstm, k_lstm)
        b_ih = jax.random.uniform(k3, (4 * hidden_dim,), jnp.float32, -k_lstm, k_lstm)
        b_hh = jax.random.uniform(k4, (4 * hidden_dim,), jnp.float32, -k_lstm, k_lstm)
        params["layers"].append(
            {"w_ih": w_ih, "w_hh": w_hh, "b": (b_ih + b_hh).reshape(1, 4 * hidden_dim)})
    k_dense = 1.0 / math.sqrt(hidden_dim)
    key, k1, k2 = jax.random.split(key, 3)
    params["w_dense"] = jax.random.uniform(k1, (hidden_dim, output_dim), jnp.float32,
                                           -k_dense, k_dense)
    params["b_dense"] = jax.random.uniform(k2, (output_dim,), jnp.float32,
                                           -k_dense, k_dense).reshape(1, output_dim)
    return params


def pack_decoder_params(params):
    """One-time weight repacking (hoisted out of the per-call forward)."""
    ph = params["ph"]
    flat = []
    for layer in params["layers"]:
        flat.extend([layer["w_ih"], layer["w_hh"], layer["b"]])
    # Block-diagonal (ph*H, ph*out) head weight + tiled bias: all timesteps projected
    # by a single matmul into a batch-first (B, ph*out) slab inside the kernel.
    w_blk = jnp.kron(jnp.eye(ph, dtype=jnp.float32), params["w_dense"])
    b_blk = jnp.tile(params["b_dense"], (1, ph))
    flat.extend([w_blk, b_blk])
    return {
        "latent_dim": params["latent_dim"],
        "hidden_dim": params["hidden_dim"],
        "output_dim": params["output_dim"],
        "num_layers": params["num_layers"],
        "ph": ph,
        "flat": tuple(jnp.asarray(a, jnp.float32) for a in flat),
    }


def make_decoder_forward(packed):
    """Returns a jitted forward(x, z) matching Decoder_repeat_latent.forward (x unused)."""
    num_layers = packed["num_layers"]
    hidden_dim = packed["hidden_dim"]
    output_dim = packed["output_dim"]
    ph = packed["ph"]
    flat = packed["flat"]

    kernel = functools.partial(_lstm_decoder_kernel, num_layers, ph, hidden_dim)
    vmem_spec = pl.BlockSpec(memory_space=pltpu.MemorySpace.VMEM)

    @jax.jit
    def forward(x, z):
        del x  # unused, as in the PyTorch module
        B = z.shape[0]
        z2d = z.reshape(B, -1).astype(jnp.float32)
        # Pad batch to the f32 sublane tile (8) so in-kernel ops / the final store are
        # unmasked on the sublane axis; padded rows stay bounded and are sliced off.
        B_pad = max(8, ((B + 7) // 8) * 8)
        if B_pad != B:
            z2d = jnp.pad(z2d, ((0, B_pad - B), (0, 0)))

        out = pl.pallas_call(
            kernel,
            out_shape=jax.ShapeDtypeStruct((B_pad, ph * output_dim), jnp.float32),
            in_specs=[vmem_spec] * (1 + len(flat)),
            out_specs=vmem_spec,
            scratch_shapes=[pltpu.VMEM((B_pad, ph * hidden_dim), jnp.float32)],
        )(z2d, *flat)

        # (B_pad, ph*out) -> slice padding -> free row-major reshape; no transpose.
        return out[:B].reshape(B, ph, output_dim)

    return forward


def _reference_forward(z, params):
    """Pure-JAX reference of the PyTorch LSTM + Linear semantics, for validation."""
    num_layers = params["num_layers"]
    hidden_dim = params["hidden_dim"]
    ph = params["ph"]
    B = z.shape[0]
    z2d = z.reshape(B, -1).astype(jnp.float32)
    h = [jnp.zeros((B, hidden_dim), jnp.float32) for _ in range(num_layers)]
    c = [jnp.zeros((B, hidden_dim), jnp.float32) for _ in range(num_layers)]
    outs = []
    H = hidden_dim
    for _ in range(ph):
        x_t = z2d
        for l in range(num_layers):
            p = params["layers"][l]
            gates = x_t @ p["w_ih"] + h[l] @ p["w_hh"] + p["b"]
            i_g = jax.nn.sigmoid(gates[:, 0 * H:1 * H])
            f_g = jax.nn.sigmoid(gates[:, 1 * H:2 * H])
            g_g = jnp.tanh(gates[:, 2 * H:3 * H])
            o_g = jax.nn.sigmoid(gates[:, 3 * H:4 * H])
            c[l] = f_g * c[l] + i_g * g_g
            h[l] = o_g * jnp.tanh(c[l])
            x_t = h[l]
        outs.append(x_t @ params["w_dense"] + params["b_dense"])
    return jnp.stack(outs, axis=1)  # (B, ph, output_dim)


if __name__ == "__main__":
    key = jax.random.PRNGKey(0)

    batch, latent_dim, hidden_dim, output_dim, num_layers, ph = 4, 8, 32, 4, 2, 8

    key, k_params, k_z, k_x = jax.random.split(key, 4)
    params = init_decoder_params(k_params, latent_dim, hidden_dim, output_dim, num_layers, ph)
    packed = pack_decoder_params(params)          # one-time weight repacking
    forward = make_decoder_forward(packed)        # one-time build + jit

    z = jax.random.normal(k_z, (batch, 1, latent_dim), jnp.float32)   # latent, repeated over ph
    x = jax.random.normal(k_x, (batch, ph, output_dim), jnp.float32)  # unused by forward()

    y_pred = forward(x, z)
    y_pred = jax.block_until_ready(y_pred)

    y_ref = _reference_forward(z, params)
    assert y_pred.shape == (batch, ph, output_dim)
    max_err = float(jnp.max(jnp.abs(y_pred - y_ref)))
    assert jnp.allclose(y_pred, y_ref, atol=2e-5, rtol=2e-5), f"mismatch vs reference (max {max_err})"

    print("KERNEL_OK")
</pallas_src>

<mosaic_0001>
module attributes {stable_mosaic.version = 11 : i64} {
  func.func @_lstm_decoder_kernel(%arg0: memref<8x8xf32, #tpu.memory_space<vmem>>, %arg1: memref<8x128xf32, #tpu.memory_space<vmem>>, %arg2: memref<32x128xf32, #tpu.memory_space<vmem>>, %arg3: memref<1x128xf32, #tpu.memory_space<vmem>>, %arg4: memref<32x128xf32, #tpu.memory_space<vmem>>, %arg5: memref<32x128xf32, #tpu.memory_space<vmem>>, %arg6: memref<1x128xf32, #tpu.memory_space<vmem>>, %arg7: memref<256x32xf32, #tpu.memory_space<vmem>>, %arg8: memref<1x32xf32, #tpu.memory_space<vmem>>, %arg9: memref<8x32xf32, #tpu.memory_space<vmem>>, %arg10: memref<8x256xf32, #tpu.memory_space<vmem>>) attributes {dimension_semantics = [], scalar_prefetch = 0 : i64, scratch_operands = 1 : i64, tpu.core_type = #tpu.core_type<tc>} {
    %c0 = arith.constant 0 : index
    %c0_0 = arith.constant 0 : index
    %0 = vector.load %arg1[%c0, %c0_0] : memref<8x128xf32, #tpu.memory_space<vmem>>, vector<8x128xf32>
    %c0_1 = arith.constant 0 : index
    %c0_2 = arith.constant 0 : index
    %1 = vector.load %arg2[%c0_1, %c0_2] : memref<32x128xf32, #tpu.memory_space<vmem>>, vector<32x128xf32>
    %c0_3 = arith.constant 0 : index
    %c0_4 = arith.constant 0 : index
    %2 = vector.load %arg3[%c0_3, %c0_4] : memref<1x128xf32, #tpu.memory_space<vmem>>, vector<1x128xf32>
    %c0_5 = arith.constant 0 : index
    %c0_6 = arith.constant 0 : index
    %3 = vector.load %arg4[%c0_5, %c0_6] : memref<32x128xf32, #tpu.memory_space<vmem>>, vector<32x128xf32>
    %c0_7 = arith.constant 0 : index
    %c0_8 = arith.constant 0 : index
    %4 = vector.load %arg5[%c0_7, %c0_8] : memref<32x128xf32, #tpu.memory_space<vmem>>, vector<32x128xf32>
    %c0_9 = arith.constant 0 : index
    %c0_10 = arith.constant 0 : index
    %5 = vector.load %arg6[%c0_9, %c0_10] : memref<1x128xf32, #tpu.memory_space<vmem>>, vector<1x128xf32>
    %c0_11 = arith.constant 0 : index
    %c0_12 = arith.constant 0 : index
    %6 = vector.load %arg0[%c0_11, %c0_12] : memref<8x8xf32, #tpu.memory_space<vmem>>, vector<8x8xf32>
    %cst = arith.constant dense<0.000000e+00> : vector<8x128xf32>
    %7 = tpu.matmul %6, %0, %cst {dimension_numbers = #tpu.dot_dimension_numbers<[1], [0], [0], [1], [0, 0, 1, 1], [], []>} : vector<8x8xf32>, vector<8x128xf32>, vector<8x128xf32> -> vector<8x128xf32>
    %8 = vector.broadcast %2 : vector<1x128xf32> to vector<8x128xf32>
    %9 = arith.addf %7, %8 : vector<8x128xf32>
    %10 = tpu.iota {dimensions = array<i32: 1>} : vector<8x128xi32>
    %c64_i32 = arith.constant 64 : i32
    %11 = vector.broadcast %c64_i32 : i32 to vector<8x128xi32>
    %12 = arith.cmpi sge, %10, %11 : vector<8x128xi32>
    %c96_i32 = arith.constant 96 : i32
    %13 = vector.broadcast %c96_i32 : i32 to vector<8x128xi32>
    %14 = arith.cmpi slt, %10, %13 : vector<8x128xi32>
    %15 = arith.andi %12, %14 : vector<8x128xi1>
    %cst_13 = arith.constant 1.000000e+00 : f32
    %cst_14 = arith.constant 5.000000e-01 : f32
    %16 = vector.broadcast %cst_13 : f32 to vector<8x128xf32>
    %17 = vector.broadcast %cst_14 : f32 to vector<8x128xf32>
    %18 = arith.select %15, %16, %17 : vector<8x128xi1>, vector<8x128xf32>
    %cst_15 = arith.constant 0.000000e+00 : f32
    %19 = vector.broadcast %cst_15 : f32 to vector<8x32xf32>
    %cst_16 = arith.constant 0.000000e+00 : f32
    %20 = vector.broadcast %cst_16 : f32 to vector<8x32xf32>
    %cst_17 = arith.constant 0.000000e+00 : f32
    %21 = vector.broadcast %cst_17 : f32 to vector<8x32xf32>
    %cst_18 = arith.constant 0.000000e+00 : f32
    %22 = vector.broadcast %cst_18 : f32 to vector<8x32xf32>
    %cst_19 = arith.constant dense<0.000000e+00> : vector<8x128xf32>
    %23 = tpu.matmul %19, %1, %cst_19 {dimension_numbers = #tpu.dot_dimension_numbers<[1], [0], [0], [1], [0, 0, 1, 1], [], []>} : vector<8x32xf32>, vector<32x128xf32>, vector<8x128xf32> -> vector<8x128xf32>
    %24 = arith.addf %9, %23 : vector<8x128xf32>
    %25 = arith.mulf %24, %18 : vector<8x128xf32>
    %26 = math.tanh %25 : vector<8x128xf32>
    %cst_20 = arith.constant 5.000000e-01 : f32
    %27 = vector.broadcast %cst_20 : f32 to vector<8x128xf32>
    %28 = arith.mulf %27, %26 : vector<8x128xf32>
    %cst_21 = arith.constant 5.000000e-01 : f32
    %29 = vector.broadcast %cst_21 : f32 to vector<8x128xf32>
    %30 = arith.addf %28, %29 : vector<8x128xf32>
    %31 = vector.extract_strided_slice %30 {offsets = [0, 0], sizes = [8, 32], strides = [1, 1]} : vector<8x128xf32> to vector<8x32xf32>
    %32 = vector.extract_strided_slice %30 {offsets = [0, 32], sizes = [8, 32], strides = [1, 1]} : vector<8x128xf32> to vector<8x32xf32>
    %33 = vector.extract_strided_slice %26 {offsets = [0, 64], sizes = [8, 32], strides = [1, 1]} : vector<8x128xf32> to vector<8x32xf32>
    %34 = vector.extract_strided_slice %30 {offsets = [0, 96], sizes = [8, 32], strides = [1, 1]} : vector<8x128xf32> to vector<8x32xf32>
    %35 = arith.mulf %32, %21 : vector<8x32xf32>
    %36 = arith.mulf %31, %33 : vector<8x32xf32>
    %37 = arith.addf %35, %36 : vector<8x32xf32>
    %38 = math.tanh %37 : vector<8x32xf32>
    %39 = arith.mulf %34, %38 : vector<8x32xf32>
    %cst_22 = arith.constant dense<0.000000e+00> : vector<8x128xf32>
    %40 = tpu.matmul %20, %4, %cst_22 {dimension_numbers = #tpu.dot_dimension_numbers<[1], [0], [0], [1], [0, 0, 1, 1], [], []>} : vector<8x32xf32>, vector<32x128xf32>, vector<8x128xf32> -> vector<8x128xf32>
    %41 = vector.broadcast %5 : vector<1x128xf32> to vector<8x128xf32>
    %42 = arith.addf %40, %41 : vector<8x128xf32>
    %cst_23 = arith.constant dense<0.000000e+00> : vector<8x128xf32>
    %43 = tpu.matmul %39, %3, %cst_23 {dimension_numbers = #tpu.dot_dimension_numbers<[1], [0], [0], [1], [0, 0, 1, 1], [], []>} : vector<8x32xf32>, vector<32x128xf32>, vector<8x128xf32> -> vector<8x128xf32>
    %44 = arith.addf %42, %43 : vector<8x128xf32>
    %45 = arith.mulf %44, %18 : vector<8x128xf32>
    %46 = math.tanh %45 : vector<8x128xf32>
    %cst_24 = arith.constant 5.000000e-01 : f32
    %47 = vector.broadcast %cst_24 : f32 to vector<8x128xf32>
    %48 = arith.mulf %47, %46 : vector<8x128xf32>
    %cst_25 = arith.constant 5.000000e-01 : f32
    %49 = vector.broadcast %cst_25 : f32 to vector<8x128xf32>
    %50 = arith.addf %48, %49 : vector<8x128xf32>
    %51 = vector.extract_strided_slice %50 {offsets = [0, 0], sizes = [8, 32], strides = [1, 1]} : vector<8x128xf32> to vector<8x32xf32>
    %52 = vector.extract_strided_slice %50 {offsets = [0, 32], sizes = [8, 32], strides = [1, 1]} : vector<8x128xf32> to vector<8x32xf32>
    %53 = vector.extract_strided_slice %46 {offsets = [0, 64], sizes = [8, 32], strides = [1, 1]} : vector<8x128xf32> to vector<8x32xf32>
    %54 = vector.extract_strided_slice %50 {offsets = [0, 96], sizes = [8, 32], strides = [1, 1]} : vector<8x128xf32> to vector<8x32xf32>
    %55 = arith.mulf %52, %22 : vector<8x32xf32>
    %56 = arith.mulf %51, %53 : vector<8x32xf32>
    %57 = arith.addf %55, %56 : vector<8x32xf32>
    %58 = math.tanh %57 : vector<8x32xf32>
    %59 = arith.mulf %54, %58 : vector<8x32xf32>
    %c0_26 = arith.constant 0 : index
    %c0_27 = arith.constant 0 : index
    %60 = vector.load %arg10[%c0_26, %c0_27] : memref<8x256xf32, #tpu.memory_space<vmem>>, vector<8x32xf32>
    tpu.vector_store %arg10[%c0_26, %c0_27], %59 {strides = array<i32>} : memref<8x256xf32, #tpu.memory_space<vmem>>, vector<8x32xf32>,
    %cst_28 = arith.constant dense<0.000000e+00> : vector<8x128xf32>
    %61 = tpu.matmul %39, %1, %cst_28 {dimension_numbers = #tpu.dot_dimension_numbers<[1], [0], [0], [1], [0, 0, 1, 1], [], []>} : vector<8x32xf32>, vector<32x128xf32>, vector<8x128xf32> -> vector<8x128xf32>
    %62 = arith.addf %9, %61 : vector<8x128xf32>
    %63 = arith.mulf %62, %18 : vector<8x128xf32>
    %64 = math.tanh %63 : vector<8x128xf32>
    %cst_29 = arith.constant 5.000000e-01 : f32
    %65 = vector.broadcast %cst_29 : f32 to vector<8x128xf32>
    %66 = arith.mulf %65, %64 : vector<8x128xf32>
    %cst_30 = arith.constant 5.000000e-01 : f32
    %67 = vector.broadcast %cst_30 : f32 to vector<8x128xf32>
    %68 = arith.addf %66, %67 : vector<8x128xf32>
    %69 = vector.extract_strided_slice %68 {offsets = [0, 0], sizes = [8, 32], strides = [1, 1]} : vector<8x128xf32> to vector<8x32xf32>
    %70 = vector.extract_strided_slice %68 {offsets = [0, 32], sizes = [8, 32], strides = [1, 1]} : vector<8x128xf32> to vector<8x32xf32>
    %71 = vector.extract_strided_slice %64 {offsets = [0, 64], sizes = [8, 32], strides = [1, 1]} : vector<8x128xf32> to vector<8x32xf32>
    %72 = vector.extract_strided_slice %68 {offsets = [0, 96], sizes = [8, 32], strides = [1, 1]} : vector<8x128xf32> to vector<8x32xf32>
    %73 = arith.mulf %70, %37 : vector<8x32xf32>
    %74 = arith.mulf %69, %71 : vector<8x32xf32>
    %75 = arith.addf %73, %74 : vector<8x32xf32>
    %76 = math.tanh %75 : vector<8x32xf32>
    %77 = arith.mulf %72, %76 : vector<8x32xf32>
    %cst_31 = arith.constant dense<0.000000e+00> : vector<8x128xf32>
    %78 = tpu.matmul %59, %4, %cst_31 {dimension_numbers = #tpu.dot_dimension_numbers<[1], [0], [0], [1], [0, 0, 1, 1], [], []>} : vector<8x32xf32>, vector<32x128xf32>, vector<8x128xf32> -> vector<8x128xf32>
    %79 = vector.broadcast %5 : vector<1x128xf32> to vector<8x128xf32>
    %80 = arith.addf %78, %79 : vector<8x128xf32>
    %cst_32 = arith.constant dense<0.000000e+00> : vector<8x128xf32>
    %81 = tpu.matmul %77, %3, %cst_32 {dimension_numbers = #tpu.dot_dimension_numbers<[1], [0], [0], [1], [0, 0, 1, 1], [], []>} : vector<8x32xf32>, vector<32x128xf32>, vector<8x128xf32> -> vector<8x128xf32>
    %82 = arith.addf %80, %81 : vector<8x128xf32>
    %83 = arith.mulf %82, %18 : vector<8x128xf32>
    %84 = math.tanh %83 : vector<8x128xf32>
    %cst_33 = arith.constant 5.000000e-01 : f32
    %85 = vector.broadcast %cst_33 : f32 to vector<8x128xf32>
    %86 = arith.mulf %85, %84 : vector<8x128xf32>
    %cst_34 = arith.constant 5.000000e-01 : f32
    %87 = vector.broadcast %cst_34 : f32 to vector<8x128xf32>
    %88 = arith.addf %86, %87 : vector<8x128xf32>
    %89 = vector.extract_strided_slice %88 {offsets = [0, 0], sizes = [8, 32], strides = [1, 1]} : vector<8x128xf32> to vector<8x32xf32>
    %90 = vector.extract_strided_slice %88 {offsets = [0, 32], sizes = [8, 32], strides = [1, 1]} : vector<8x128xf32> to vector<8x32xf32>
    %91 = vector.extract_strided_slice %84 {offsets = [0, 64], sizes = [8, 32], strides = [1, 1]} : vector<8x128xf32> to vector<8x32xf32>
    %92 = vector.extract_strided_slice %88 {offsets = [0, 96], sizes = [8, 32], strides = [1, 1]} : vector<8x128xf32> to vector<8x32xf32>
    %93 = arith.mulf %90, %57 : vector<8x32xf32>
    %94 = arith.mulf %89, %91 : vector<8x32xf32>
    %95 = arith.addf %93, %94 : vector<8x32xf32>
    %96 = math.tanh %95 : vector<8x32xf32>
    %97 = arith.mulf %92, %96 : vector<8x32xf32>
    %c0_35 = arith.constant 0 : index
    %c32 = arith.constant 32 : index
    %98 = vector.load %arg10[%c0_35, %c32] : memref<8x256xf32, #tpu.memory_space<vmem>>, vector<8x32xf32>
    tpu.vector_store %arg10[%c0_35, %c32], %97 {strides = array<i32>} : memref<8x256xf32, #tpu.memory_space<vmem>>, vector<8x32xf32>,
    %cst_36 = arith.constant dense<0.000000e+00> : vector<8x128xf32>
    %99 = tpu.matmul %77, %1, %cst_36 {dimension_numbers = #tpu.dot_dimension_numbers<[1], [0], [0], [1], [0, 0, 1, 1], [], []>} : vector<8x32xf32>, vector<32x128xf32>, vector<8x128xf32> -> vector<8x128xf32>
    %100 = arith.addf %9, %99 : vector<8x128xf32>
    %101 = arith.mulf %100, %18 : vector<8x128xf32>
    %102 = math.tanh %101 : vector<8x128xf32>
    %cst_37 = arith.constant 5.000000e-01 : f32
    %103 = vector.broadcast %cst_37 : f32 to vector<8x128xf32>
    %104 = arith.mulf %103, %102 : vector<8x128xf32>
    %cst_38 = arith.constant 5.000000e-01 : f32
    %105 = vector.broadcast %cst_38 : f32 to vector<8x128xf32>
    %106 = arith.addf %104, %105 : vector<8x128xf32>
    %107 = vector.extract_strided_slice %106 {offsets = [0, 0], sizes = [8, 32], strides = [1, 1]} : vector<8x128xf32> to vector<8x32xf32>
    %108 = vector.extract_strided_slice %106 {offsets = [0, 32], sizes = [8, 32], strides = [1, 1]} : vector<8x128xf32> to vector<8x32xf32>
    %109 = vector.extract_strided_slice %102 {offsets = [0, 64], sizes = [8, 32], strides = [1, 1]} : vector<8x128xf32> to vector<8x32xf32>
    %110 = vector.extract_strided_slice %106 {offsets = [0, 96], sizes = [8, 32], strides = [1, 1]} : vector<8x128xf32> to vector<8x32xf32>
    %111 = arith.mulf %108, %75 : vector<8x32xf32>
    %112 = arith.mulf %107, %109 : vector<8x32xf32>
    %113 = arith.addf %111, %112 : vector<8x32xf32>
    %114 = math.tanh %113 : vector<8x32xf32>
    %115 = arith.mulf %110, %114 : vector<8x32xf32>
    %cst_39 = arith.constant dense<0.000000e+00> : vector<8x128xf32>
    %116 = tpu.matmul %97, %4, %cst_39 {dimension_numbers = #tpu.dot_dimension_numbers<[1], [0], [0], [1], [0, 0, 1, 1], [], []>} : vector<8x32xf32>, vector<32x128xf32>, vector<8x128xf32> -> vector<8x128xf32>
    %117 = vector.broadcast %5 : vector<1x128xf32> to vector<8x128xf32>
    %118 = arith.addf %116, %117 : vector<8x128xf32>
    %cst_40 = arith.constant dense<0.000000e+00> : vector<8x128xf32>
    %119 = tpu.matmul %115, %3, %cst_40 {dimension_numbers = #tpu.dot_dimension_numbers<[1], [0], [0], [1], [0, 0, 1, 1], [], []>} : vector<8x32xf32>, vector<32x128xf32>, vector<8x128xf32> -> vector<8x128xf32>
    %120 = arith.addf %118, %119 : vector<8x128xf32>
    %121 = arith.mulf %120, %18 : vector<8x128xf32>
    %122 = math.tanh %121 : vector<8x128xf32>
    %cst_41 = arith.constant 5.000000e-01 : f32
    %123 = vector.broadcast %cst_41 : f32 to vector<8x128xf32>
    %124 = arith.mulf %123, %122 : vector<8x128xf32>
    %cst_42 = arith.constant 5.000000e-01 : f32
    %125 = vector.broadcast %cst_42 : f32 to vector<8x128xf32>
    %126 = arith.addf %124, %125 : vector<8x128xf32>
    %127 = vector.extract_strided_slice %126 {offsets = [0, 0], sizes = [8, 32], strides = [1, 1]} : vector<8x128xf32> to vector<8x32xf32>
    %128 = vector.extract_strided_slice %126 {offsets = [0, 32], sizes = [8, 32], strides = [1, 1]} : vector<8x128xf32> to vector<8x32xf32>
    %129 = vector.extract_strided_slice %122 {offsets = [0, 64], sizes = [8, 32], strides = [1, 1]} : vector<8x128xf32> to vector<8x32xf32>
    %130 = vector.extract_strided_slice %126 {offsets = [0, 96], sizes = [8, 32], strides = [1, 1]} : vector<8x128xf32> to vector<8x32xf32>
    %131 = arith.mulf %128, %95 : vector<8x32xf32>
    %132 = arith.mulf %127, %129 : vector<8x32xf32>
    %133 = arith.addf %131, %132 : vector<8x32xf32>
    %134 = math.tanh %133 : vector<8x32xf32>
    %135 = arith.mulf %130, %134 : vector<8x32xf32>
    %c0_43 = arith.constant 0 : index
    %c64 = arith.constant 64 : index
    %136 = vector.load %arg10[%c0_43, %c64] : memref<8x256xf32, #tpu.memory_space<vmem>>, vector<8x32xf32>
    tpu.vector_store %arg10[%c0_43, %c64], %135 {strides = array<i32>} : memref<8x256xf32, #tpu.memory_space<vmem>>, vector<8x32xf32>,
    %cst_44 = arith.constant dense<0.000000e+00> : vector<8x128xf32>
    %137 = tpu.matmul %115, %1, %cst_44 {dimension_numbers = #tpu.dot_dimension_numbers<[1], [0], [0], [1], [0, 0, 1, 1], [], []>} : vector<8x32xf32>, vector<32x128xf32>, vector<8x128xf32> -> vector<8x128xf32>
    %138 = arith.addf %9, %137 : vector<8x128xf32>
    %139 = arith.mulf %138, %18 : vector<8x128xf32>
    %140 = math.tanh %139 : vector<8x128xf32>
    %cst_45 = arith.constant 5.000000e-01 : f32
    %141 = vector.broadcast %cst_45 : f32 to vector<8x128xf32>
    %142 = arith.mulf %141, %140 : vector<8x128xf32>
    %cst_46 = arith.constant 5.000000e-01 : f32
    %143 = vector.broadcast %cst_46 : f32 to vector<8x128xf32>
    %144 = arith.addf %142, %143 : vector<8x128xf32>
    %145 = vector.extract_strided_slice %144 {offsets = [0, 0], sizes = [8, 32], strides = [1, 1]} : vector<8x128xf32> to vector<8x32xf32>
    %146 = vector.extract_strided_slice %144 {offsets = [0, 32], sizes = [8, 32], strides = [1, 1]} : vector<8x128xf32> to vector<8x32xf32>
    %147 = vector.extract_strided_slice %140 {offsets = [0, 64], sizes = [8, 32], strides = [1, 1]} : vector<8x128xf32> to vector<8x32xf32>
    %148 = vector.extract_strided_slice %144 {offsets = [0, 96], sizes = [8, 32], strides = [1, 1]} : vector<8x128xf32> to vector<8x32xf32>
    %149 = arith.mulf %146, %113 : vector<8x32xf32>
    %150 = arith.mulf %145, %147 : vector<8x32xf32>
    %151 = arith.addf %149, %150 : vector<8x32xf32>
    %152 = math.tanh %151 : vector<8x32xf32>
    %153 = arith.mulf %148, %152 : vector<8x32xf32>
    %cst_47 = arith.constant dense<0.000000e+00> : vector<8x128xf32>
    %154 = tpu.matmul %135, %4, %cst_47 {dimension_numbers = #tpu.dot_dimension_numbers<[1], [0], [0], [1], [0, 0, 1, 1], [], []>} : vector<8x32xf32>, vector<32x128xf32>, vector<8x128xf32> -> vector<8x128xf32>
    %155 = vector.broadcast %5 : vector<1x128xf32> to vector<8x128xf32>
    %156 = arith.addf %154, %155 : vector<8x128xf32>
    %cst_48 = arith.constant dense<0.000000e+00> : vector<8x128xf32>
    %157 = tpu.matmul %153, %3, %cst_48 {dimension_numbers = #tpu.dot_dimension_numbers<[1], [0], [0], [1], [0, 0, 1, 1], [], []>} : vector<8x32xf32>, vector<32x128xf32>, vector<8x128xf32> -> vector<8x128xf32>
    %158 = arith.addf %156, %157 : vector<8x128xf32>
    %159 = arith.mulf %158, %18 : vector<8x128xf32>
    %160 = math.tanh %159 : vector<8x128xf32>
    %cst_49 = arith.constant 5.000000e-01 : f32
    %161 = vector.broadcast %cst_49 : f32 to vector<8x128xf32>
    %162 = arith.mulf %161, %160 : vector<8x128xf32>
    %cst_50 = arith.constant 5.000000e-01 : f32
    %163 = vector.broadcast %cst_50 : f32 to vector<8x128xf32>
    %164 = arith.addf %162, %163 : vector<8x128xf32>
    %165 = vector.extract_strided_slice %164 {offsets = [0, 0], sizes = [8, 32], strides = [1, 1]} : vector<8x128xf32> to vector<8x32xf32>
    %166 = vector.extract_strided_slice %164 {offsets = [0, 32], sizes = [8, 32], strides = [1, 1]} : vector<8x128xf32> to vector<8x32xf32>
    %167 = vector.extract_strided_slice %160 {offsets = [0, 64], sizes = [8, 32], strides = [1, 1]} : vector<8x128xf32> to vector<8x32xf32>
    %168 = vector.extract_strided_slice %164 {offsets = [0, 96], sizes = [8, 32], strides = [1, 1]} : vector<8x128xf32> to vector<8x32xf32>
    %169 = arith.mulf %166, %133 : vector<8x32xf32>
    %170 = arith.mulf %165, %167 : vector<8x32xf32>
    %171 = arith.addf %169, %170 : vector<8x32xf32>
    %172 = math.tanh %171 : vector<8x32xf32>
    %173 = arith.mulf %168, %172 : vector<8x32xf32>
    %c0_51 = arith.constant 0 : index
    %c96 = arith.constant 96 : index
    %174 = vector.load %arg10[%c0_51, %c96] : memref<8x256xf32, #tpu.memory_space<vmem>>, vector<8x32xf32>
    tpu.vector_store %arg10[%c0_51, %c96], %173 {strides = array<i32>} : memref<8x256xf32, #tpu.memory_space<vmem>>, vector<8x32xf32>,
    %cst_52 = arith.constant dense<0.000000e+00> : vector<8x128xf32>
    %175 = tpu.matmul %153, %1, %cst_52 {dimension_numbers = #tpu.dot_dimension_numbers<[1], [0], [0], [1], [0, 0, 1, 1], [], []>} : vector<8x32xf32>, vector<32x128xf32>, vector<8x128xf32> -> vector<8x128xf32>
    %176 = arith.addf %9, %175 : vector<8x128xf32>
    %177 = arith.mulf %176, %18 : vector<8x128xf32>
    %178 = math.tanh %177 : vector<8x128xf32>
    %cst_53 = arith.constant 5.000000e-01 : f32
    %179 = vector.broadcast %cst_53 : f32 to vector<8x128xf32>
    %180 = arith.mulf %179, %178 : vector<8x128xf32>
    %cst_54 = arith.constant 5.000000e-01 : f32
    %181 = vector.broadcast %cst_54 : f32 to vector<8x128xf32>
    %182 = arith.addf %180, %181 : vector<8x128xf32>
    %183 = vector.extract_strided_slice %182 {offsets = [0, 0], sizes = [8, 32], strides = [1, 1]} : vector<8x128xf32> to vector<8x32xf32>
    %184 = vector.extract_strided_slice %182 {offsets = [0, 32], sizes = [8, 32], strides = [1, 1]} : vector<8x128xf32> to vector<8x32xf32>
    %185 = vector.extract_strided_slice %178 {offsets = [0, 64], sizes = [8, 32], strides = [1, 1]} : vector<8x128xf32> to vector<8x32xf32>
    %186 = vector.extract_strided_slice %182 {offsets = [0, 96], sizes = [8, 32], strides = [1, 1]} : vector<8x128xf32> to vector<8x32xf32>
    %187 = arith.mulf %184, %151 : vector<8x32xf32>
    %188 = arith.mulf %183, %185 : vector<8x32xf32>
    %189 = arith.addf %187, %188 : vector<8x32xf32>
    %190 = math.tanh %189 : vector<8x32xf32>
    %191 = arith.mulf %186, %190 : vector<8x32xf32>
    %cst_55 = arith.constant dense<0.000000e+00> : vector<8x128xf32>
    %192 = tpu.matmul %173, %4, %cst_55 {dimension_numbers = #tpu.dot_dimension_numbers<[1], [0], [0], [1], [0, 0, 1, 1], [], []>} : vector<8x32xf32>, vector<32x128xf32>, vector<8x128xf32> -> vector<8x128xf32>
    %193 = vector.broadcast %5 : vector<1x128xf32> to vector<8x128xf32>
    %194 = arith.addf %192, %193 : vector<8x128xf32>
    %cst_56 = arith.constant dense<0.000000e+00> : vector<8x128xf32>
    %195 = tpu.matmul %191, %3, %cst_56 {dimension_numbers = #tpu.dot_dimension_numbers<[1], [0], [0], [1], [0, 0, 1, 1], [], []>} : vector<8x32xf32>, vector<32x128xf32>, vector<8x128xf32> -> vector<8x128xf32>
    %196 = arith.addf %194, %195 : vector<8x128xf32>
    %197 = arith.mulf %196, %18 : vector<8x128xf32>
    %198 = math.tanh %197 : vector<8x128xf32>
    %cst_57 = arith.constant 5.000000e-01 : f32
    %199 = vector.broadcast %cst_57 : f32 to vector<8x128xf32>
    %200 = arith.mulf %199, %198 : vector<8x128xf32>
    %cst_58 = arith.constant 5.000000e-01 : f32
    %201 = vector.broadcast %cst_58 : f32 to vector<8x128xf32>
    %202 = arith.addf %200, %201 : vector<8x128xf32>
    %203 = vector.extract_strided_slice %202 {offsets = [0, 0], sizes = [8, 32], strides = [1, 1]} : vector<8x128xf32> to vector<8x32xf32>
    %204 = vector.extract_strided_slice %202 {offsets = [0, 32], sizes = [8, 32], strides = [1, 1]} : vector<8x128xf32> to vector<8x32xf32>
    %205 = vector.extract_strided_slice %198 {offsets = [0, 64], sizes = [8, 32], strides = [1, 1]} : vector<8x128xf32> to vector<8x32xf32>
    %206 = vector.extract_strided_slice %202 {offsets = [0, 96], sizes = [8, 32], strides = [1, 1]} : vector<8x128xf32> to vector<8x32xf32>
    %207 = arith.mulf %204, %171 : vector<8x32xf32>
    %208 = arith.mulf %203, %205 : vector<8x32xf32>
    %209 = arith.addf %207, %208 : vector<8x32xf32>
    %210 = math.tanh %209 : vector<8x32xf32>
    %211 = arith.mulf %206, %210 : vector<8x32xf32>
    %c0_59 = arith.constant 0 : index
    %c128 = arith.constant 128 : index
    %212 = vector.load %arg10[%c0_59, %c128] : memref<8x256xf32, #tpu.memory_space<vmem>>, vector<8x32xf32>
    tpu.vector_store %arg10[%c0_59, %c128], %211 {strides = array<i32>} : memref<8x256xf32, #tpu.memory_space<vmem>>, vector<8x32xf32>,
    %cst_60 = arith.constant dense<0.000000e+00> : vector<8x128xf32>
    %213 = tpu.matmul %191, %1, %cst_60 {dimension_numbers = #tpu.dot_dimension_numbers<[1], [0], [0], [1], [0, 0, 1, 1], [], []>} : vector<8x32xf32>, vector<32x128xf32>, vector<8x128xf32> -> vector<8x128xf32>
    %214 = arith.addf %9, %213 : vector<8x128xf32>
    %215 = arith.mulf %214, %18 : vector<8x128xf32>
    %216 = math.tanh %215 : vector<8x128xf32>
    %cst_61 = arith.constant 5.000000e-01 : f32
    %217 = vector.broadcast %cst_61 : f32 to vector<8x128xf32>
    %218 = arith.mulf %217, %216 : vector<8x128xf32>
    %cst_62 = arith.constant 5.000000e-01 : f32
    %219 = vector.broadcast %cst_62 : f32 to vector<8x128xf32>
    %220 = arith.addf %218, %219 : vector<8x128xf32>
    %221 = vector.extract_strided_slice %220 {offsets = [0, 0], sizes = [8, 32], strides = [1, 1]} : vector<8x128xf32> to vector<8x32xf32>
    %222 = vector.extract_strided_slice %220 {offsets = [0, 32], sizes = [8, 32], strides = [1, 1]} : vector<8x128xf32> to vector<8x32xf32>
    %223 = vector.extract_strided_slice %216 {offsets = [0, 64], sizes = [8, 32], strides = [1, 1]} : vector<8x128xf32> to vector<8x32xf32>
    %224 = vector.extract_strided_slice %220 {offsets = [0, 96], sizes = [8, 32], strides = [1, 1]} : vector<8x128xf32> to vector<8x32xf32>
    %225 = arith.mulf %222, %189 : vector<8x32xf32>
    %226 = arith.mulf %221, %223 : vector<8x32xf32>
    %227 = arith.addf %225, %226 : vector<8x32xf32>
    %228 = math.tanh %227 : vector<8x32xf32>
    %229 = arith.mulf %224, %228 : vector<8x32xf32>
    %cst_63 = arith.constant dense<0.000000e+00> : vector<8x128xf32>
    %230 = tpu.matmul %211, %4, %cst_63 {dimension_numbers = #tpu.dot_dimension_numbers<[1], [0], [0], [1], [0, 0, 1, 1], [], []>} : vector<8x32xf32>, vector<32x128xf32>, vector<8x128xf32> -> vector<8x128xf32>
    %231 = vector.broadcast %5 : vector<1x128xf32> to vector<8x128xf32>
    %232 = arith.addf %230, %231 : vector<8x128xf32>
    %cst_64 = arith.constant dense<0.000000e+00> : vector<8x128xf32>
    %233 = tpu.matmul %229, %3, %cst_64 {dimension_numbers = #tpu.dot_dimension_numbers<[1], [0], [0], [1], [0, 0, 1, 1], [], []>} : vector<8x32xf32>, vector<32x128xf32>, vector<8x128xf32> -> vector<8x128xf32>
    %234 = arith.addf %232, %233 : vector<8x128xf32>
    %235 = arith.mulf %234, %18 : vector<8x128xf32>
    %236 = math.tanh %235 : vector<8x128xf32>
    %cst_65 = arith.constant 5.000000e-01 : f32
    %237 = vector.broadcast %cst_65 : f32 to vector<8x128xf32>
    %238 = arith.mulf %237, %236 : vector<8x128xf32>
    %cst_66 = arith.constant 5.000000e-01 : f32
    %239 = vector.broadcast %cst_66 : f32 to vector<8x128xf32>
    %240 = arith.addf %238, %239 : vector<8x128xf32>
    %241 = vector.extract_strided_slice %240 {offsets = [0, 0], sizes = [8, 32], strides = [1, 1]} : vector<8x128xf32> to vector<8x32xf32>
    %242 = vector.extract_strided_slice %240 {offsets = [0, 32], sizes = [8, 32], strides = [1, 1]} : vector<8x128xf32> to vector<8x32xf32>
    %243 = vector.extract_strided_slice %236 {offsets = [0, 64], sizes = [8, 32], strides = [1, 1]} : vector<8x128xf32> to vector<8x32xf32>
    %244 = vector.extract_strided_slice %240 {offsets = [0, 96], sizes = [8, 32], strides = [1, 1]} : vector<8x128xf32> to vector<8x32xf32>
    %245 = arith.mulf %242, %209 : vector<8x32xf32>
    %246 = arith.mulf %241, %243 : vector<8x32xf32>
    %247 = arith.addf %245, %246 : vector<8x32xf32>
    %248 = math.tanh %247 : vector<8x32xf32>
    %249 = arith.mulf %244, %248 : vector<8x32xf32>
    %c0_67 = arith.constant 0 : index
    %c160 = arith.constant 160 : index
    %250 = vector.load %arg10[%c0_67, %c160] : memref<8x256xf32, #tpu.memory_space<vmem>>, vector<8x32xf32>
    tpu.vector_store %arg10[%c0_67, %c160], %249 {strides = array<i32>} : memref<8x256xf32, #tpu.memory_space<vmem>>, vector<8x32xf32>,
    %cst_68 = arith.constant dense<0.000000e+00> : vector<8x128xf32>
    %251 = tpu.matmul %229, %1, %cst_68 {dimension_numbers = #tpu.dot_dimension_numbers<[1], [0], [0], [1], [0, 0, 1, 1], [], []>} : vector<8x32xf32>, vector<32x128xf32>, vector<8x128xf32> -> vector<8x128xf32>
    %252 = arith.addf %9, %251 : vector<8x128xf32>
    %253 = arith.mulf %252, %18 : vector<8x128xf32>
    %254 = math.tanh %253 : vector<8x128xf32>
    %cst_69 = arith.constant 5.000000e-01 : f32
    %255 = vector.broadcast %cst_69 : f32 to vector<8x128xf32>
    %256 = arith.mulf %255, %254 : vector<8x128xf32>
    %cst_70 = arith.constant 5.000000e-01 : f32
    %257 = vector.broadcast %cst_70 : f32 to vector<8x128xf32>
    %258 = arith.addf %256, %257 : vector<8x128xf32>
    %259 = vector.extract_strided_slice %258 {offsets = [0, 0], sizes = [8, 32], strides = [1, 1]} : vector<8x128xf32> to vector<8x32xf32>
    %260 = vector.extract_strided_slice %258 {offsets = [0, 32], sizes = [8, 32], strides = [1, 1]} : vector<8x128xf32> to vector<8x32xf32>
    %261 = vector.extract_strided_slice %254 {offsets = [0, 64], sizes = [8, 32], strides = [1, 1]} : vector<8x128xf32> to vector<8x32xf32>
    %262 = vector.extract_strided_slice %258 {offsets = [0, 96], sizes = [8, 32], strides = [1, 1]} : vector<8x128xf32> to vector<8x32xf32>
    %263 = arith.mulf %260, %227 : vector<8x32xf32>
    %264 = arith.mulf %259, %261 : vector<8x32xf32>
    %265 = arith.addf %263, %264 : vector<8x32xf32>
    %266 = math.tanh %265 : vector<8x32xf32>
    %267 = arith.mulf %262, %266 : vector<8x32xf32>
    %cst_71 = arith.constant dense<0.000000e+00> : vector<8x128xf32>
    %268 = tpu.matmul %249, %4, %cst_71 {dimension_numbers = #tpu.dot_dimension_numbers<[1], [0], [0], [1], [0, 0, 1, 1], [], []>} : vector<8x32xf32>, vector<32x128xf32>, vector<8x128xf32> -> vector<8x128xf32>
    %269 = vector.broadcast %5 : vector<1x128xf32> to vector<8x128xf32>
    %270 = arith.addf %268, %269 : vector<8x128xf32>
    %cst_72 = arith.constant dense<0.000000e+00> : vector<8x128xf32>
    %271 = tpu.matmul %267, %3, %cst_72 {dimension_numbers = #tpu.dot_dimension_numbers<[1], [0], [0], [1], [0, 0, 1, 1], [], []>} : vector<8x32xf32>, vector<32x128xf32>, vector<8x128xf32> -> vector<8x128xf32>
    %272 = arith.addf %270, %271 : vector<8x128xf32>
    %273 = arith.mulf %272, %18 : vector<8x128xf32>
    %274 = math.tanh %273 : vector<8x128xf32>
    %cst_73 = arith.constant 5.000000e-01 : f32
    %275 = vector.broadcast %cst_73 : f32 to vector<8x128xf32>
    %276 = arith.mulf %275, %274 : vector<8x128xf32>
    %cst_74 = arith.constant 5.000000e-01 : f32
    %277 = vector.broadcast %cst_74 : f32 to vector<8x128xf32>
    %278 = arith.addf %276, %277 : vector<8x128xf32>
    %279 = vector.extract_strided_slice %278 {offsets = [0, 0], sizes = [8, 32], strides = [1, 1]} : vector<8x128xf32> to vector<8x32xf32>
    %280 = vector.extract_strided_slice %278 {offsets = [0, 32], sizes = [8, 32], strides = [1, 1]} : vector<8x128xf32> to vector<8x32xf32>
    %281 = vector.extract_strided_slice %274 {offsets = [0, 64], sizes = [8, 32], strides = [1, 1]} : vector<8x128xf32> to vector<8x32xf32>
    %282 = vector.extract_strided_slice %278 {offsets = [0, 96], sizes = [8, 32], strides = [1, 1]} : vector<8x128xf32> to vector<8x32xf32>
    %283 = arith.mulf %280, %247 : vector<8x32xf32>
    %284 = arith.mulf %279, %281 : vector<8x32xf32>
    %285 = arith.addf %283, %284 : vector<8x32xf32>
    %286 = math.tanh %285 : vector<8x32xf32>
    %287 = arith.mulf %282, %286 : vector<8x32xf32>
    %c0_75 = arith.constant 0 : index
    %c192 = arith.constant 192 : index
    %288 = vector.load %arg10[%c0_75, %c192] : memref<8x256xf32, #tpu.memory_space<vmem>>, vector<8x32xf32>
    tpu.vector_store %arg10[%c0_75, %c192], %287 {strides = array<i32>} : memref<8x256xf32, #tpu.memory_space<vmem>>, vector<8x32xf32>,
    %cst_76 = arith.constant dense<0.000000e+00> : vector<8x128xf32>
    %289 = tpu.matmul %267, %1, %cst_76 {dimension_numbers = #tpu.dot_dimension_numbers<[1], [0], [0], [1], [0, 0, 1, 1], [], []>} : vector<8x32xf32>, vector<32x128xf32>, vector<8x128xf32> -> vector<8x128xf32>
    %290 = arith.addf %9, %289 : vector<8x128xf32>
    %291 = arith.mulf %290, %18 : vector<8x128xf32>
    %292 = math.tanh %291 : vector<8x128xf32>
    %cst_77 = arith.constant 5.000000e-01 : f32
    %293 = vector.broadcast %cst_77 : f32 to vector<8x128xf32>
    %294 = arith.mulf %293, %292 : vector<8x128xf32>
    %cst_78 = arith.constant 5.000000e-01 : f32
    %295 = vector.broadcast %cst_78 : f32 to vector<8x128xf32>
    %296 = arith.addf %294, %295 : vector<8x128xf32>
    %297 = vector.extract_strided_slice %296 {offsets = [0, 0], sizes = [8, 32], strides = [1, 1]} : vector<8x128xf32> to vector<8x32xf32>
    %298 = vector.extract_strided_slice %296 {offsets = [0, 32], sizes = [8, 32], strides = [1, 1]} : vector<8x128xf32> to vector<8x32xf32>
    %299 = vector.extract_strided_slice %292 {offsets = [0, 64], sizes = [8, 32], strides = [1, 1]} : vector<8x128xf32> to vector<8x32xf32>
    %300 = vector.extract_strided_slice %296 {offsets = [0, 96], sizes = [8, 32], strides = [1, 1]} : vector<8x128xf32> to vector<8x32xf32>
    %301 = arith.mulf %298, %265 : vector<8x32xf32>
    %302 = arith.mulf %297, %299 : vector<8x32xf32>
    %303 = arith.addf %301, %302 : vector<8x32xf32>
    %304 = math.tanh %303 : vector<8x32xf32>
    %305 = arith.mulf %300, %304 : vector<8x32xf32>
    %cst_79 = arith.constant dense<0.000000e+00> : vector<8x128xf32>
    %306 = tpu.matmul %287, %4, %cst_79 {dimension_numbers = #tpu.dot_dimension_numbers<[1], [0], [0], [1], [0, 0, 1, 1], [], []>} : vector<8x32xf32>, vector<32x128xf32>, vector<8x128xf32> -> vector<8x128xf32>
    %307 = vector.broadcast %5 : vector<1x128xf32> to vector<8x128xf32>
    %308 = arith.addf %306, %307 : vector<8x128xf32>
    %cst_80 = arith.constant dense<0.000000e+00> : vector<8x128xf32>
    %309 = tpu.matmul %305, %3, %cst_80 {dimension_numbers = #tpu.dot_dimension_numbers<[1], [0], [0], [1], [0, 0, 1, 1], [], []>} : vector<8x32xf32>, vector<32x128xf32>, vector<8x128xf32> -> vector<8x128xf32>
    %310 = arith.addf %308, %309 : vector<8x128xf32>
    %311 = arith.mulf %310, %18 : vector<8x128xf32>
    %312 = math.tanh %311 : vector<8x128xf32>
    %cst_81 = arith.constant 5.000000e-01 : f32
    %313 = vector.broadcast %cst_81 : f32 to vector<8x128xf32>
    %314 = arith.mulf %313, %312 : vector<8x128xf32>
    %cst_82 = arith.constant 5.000000e-01 : f32
    %315 = vector.broadcast %cst_82 : f32 to vector<8x128xf32>
    %316 = arith.addf %314, %315 : vector<8x128xf32>
    %317 = vector.extract_strided_slice %316 {offsets = [0, 0], sizes = [8, 32], strides = [1, 1]} : vector<8x128xf32> to vector<8x32xf32>
    %318 = vector.extract_strided_slice %316 {offsets = [0, 32], sizes = [8, 32], strides = [1, 1]} : vector<8x128xf32> to vector<8x32xf32>
    %319 = vector.extract_strided_slice %312 {offsets = [0, 64], sizes = [8, 32], strides = [1, 1]} : vector<8x128xf32> to vector<8x32xf32>
    %320 = vector.extract_strided_slice %316 {offsets = [0, 96], sizes = [8, 32], strides = [1, 1]} : vector<8x128xf32> to vector<8x32xf32>
    %321 = arith.mulf %318, %285 : vector<8x32xf32>
    %322 = arith.mulf %317, %319 : vector<8x32xf32>
    %323 = arith.addf %321, %322 : vector<8x32xf32>
    %324 = math.tanh %323 : vector<8x32xf32>
    %325 = arith.mulf %320, %324 : vector<8x32xf32>
    %c0_83 = arith.constant 0 : index
    %c224 = arith.constant 224 : index
    %326 = vector.load %arg10[%c0_83, %c224] : memref<8x256xf32, #tpu.memory_space<vmem>>, vector<8x32xf32>
    tpu.vector_store %arg10[%c0_83, %c224], %325 {strides = array<i32>} : memref<8x256xf32, #tpu.memory_space<vmem>>, vector<8x32xf32>,
    %c0_84 = arith.constant 0 : index
    %c0_85 = arith.constant 0 : index
    %327 = vector.load %arg10[%c0_84, %c0_85] : memref<8x256xf32, #tpu.memory_space<vmem>>, vector<8x256xf32>
    %c0_86 = arith.constant 0 : index
    %c0_87 = arith.constant 0 : index
    %328 = vector.load %arg7[%c0_86, %c0_87] : memref<256x32xf32, #tpu.memory_space<vmem>>, vector<256x32xf32>
    %c0_88 = arith.constant 0 : index
    %c0_89 = arith.constant 0 : index
    %329 = vector.load %arg8[%c0_88, %c0_89] : memref<1x32xf32, #tpu.memory_space<vmem>>, vector<1x32xf32>
    %cst_90 = arith.constant dense<0.000000e+00> : vector<8x32xf32>
    %330 = tpu.matmul %327, %328, %cst_90 {dimension_numbers = #tpu.dot_dimension_numbers<[1], [0], [0], [1], [0, 0, 1, 1], [], []>} : vector<8x256xf32>, vector<256x32xf32>, vector<8x32xf32> -> vector<8x32xf32>
    %331 = vector.broadcast %329 : vector<1x32xf32> to vector<8x32xf32>
    %332 = arith.addf %330, %331 : vector<8x32xf32>
    %c0_91 = arith.constant 0 : index
    %c0_92 = arith.constant 0 : index
    %333 = vector.load %arg9[%c0_91, %c0_92] : memref<8x32xf32, #tpu.memory_space<vmem>>, vector<8x32xf32>
    tpu.vector_store %arg9[%c0_91, %c0_92], %332 {strides = array<i32>} : memref<8x32xf32, #tpu.memory_space<vmem>>, vector<8x32xf32>,
    return
  }
}

</mosaic_0001>

<llo_original>
// kernel: forward.1
$region0: #{forward.1}
  #allocation0 [shape = 'u32[]', space=smem, size = 0x4, offset = 0x4, fixed_abs, tag = 'smem constant byte address 0x4 - core index']
  #allocation1 [shape = 'u32[144,128]{1,0:T(1,128)}', space=vmem, size = 0x12000, scoped, tag = 'internal scratch']
  #allocation2 [shape = 'f32[8,256]{1,0:T(8,128)}', space=vmem, size = 0x2000, scoped, tag = 'scratch operand']
  %s0 = inlined_call_operand.vmem [shape: f32[8,8], index: 0, kind: input, shape index: {}]
  %s1 = inlined_call_operand.hbm [shape: f32[8,128], index: 1, kind: input, shape index: {}]
  %s2 = inlined_call_operand.hbm [shape: f32[32,128], index: 2, kind: input, shape index: {}]
  %s3 = inlined_call_operand.vmem [shape: f32[1,128], index: 3, kind: input, shape index: {}]
  %s4 = inlined_call_operand.hbm [shape: f32[32,128], index: 4, kind: input, shape index: {}]
  %s5 = inlined_call_operand.vmem [shape: f32[32,128], index: 5, kind: input, shape index: {}]
  %s6 = inlined_call_operand.vmem [shape: f32[1,128], index: 6, kind: input, shape index: {}]
  %s7 = inlined_call_operand.hbm [shape: f32[256,32], index: 7, kind: input, shape index: {}]
  %s8 = inlined_call_operand.vmem [shape: f32[1,32], index: 8, kind: input, shape index: {}]
  %s9 = inlined_call_operand.vmem [shape: f32[8,32], index: 9, kind: output, shape index: {}]
  %s10 = sld [smem:[#allocation0]]
  $region62: #{forward.1} parent=0
    _
  %s12 = ssub.s32 1, %s10
  %s13 = scalar_select 0, %s12, %s10
  $region1: #{forward.1} parent=0
    #allocation3 [shape = 'u8[4096]{0}', space=vmem, size = 0x1000, scoped, tag = 'input window, operand 1, single buffered']
    #allocation4 [shape = 's32[1]{0}', space=sflag, size = 0x4, scoped, tag = 'scoped memory for forward.1']
    #allocation5 [shape = 'u8[16384]{0}', space=vmem, size = 0x4000, scoped, tag = 'input window, operand 2, single buffered']
    #allocation6 [shape = 's32[1]{0}', space=sflag, size = 0x4, scoped, tag = 'scoped memory for forward.1']
    #allocation7 [shape = 'u8[16384]{0}', space=vmem, size = 0x4000, scoped, tag = 'input window, operand 4, single buffered']
    #allocation8 [shape = 'u8[131072]{0}', space=vmem, size = 0x20000, scoped, tag = 'input window, operand 7, single buffered']
    #allocation9 [shape = 's32[1]{0}', space=sflag, size = 0x4, scoped, tag = 'scoped memory for forward.1']
    %14 = vsyncpa [#allocation4], 0
    %15 = vsyncpa [#allocation6], 0
    %16 = vsyncpa [#allocation9], 0
    // Predicated region
    $region2: #{forward.1} parent=1 // pred_check
      _
    $region3: #{forward.1} parent=1 // pred_check_branch
      %18 = sbr.rel (0) target = $region5
    $region4: #{forward.1} parent=1 // pred_region
      _
    $region5: #{forward.1} parent=1 // pred_fallthru
      _
    // Predicated region
    $region6: #{forward.1} parent=1 // pred_check
      _
    $region7: #{forward.1} parent=1 // pred_check_branch
      %20 = sbr.rel (0) target = $region9
    $region8: #{forward.1} parent=1 // pred_region
      %s22 = ssub.s32 128, 128
      %23 = vsyncadd [#allocation4], %s22
      %s25 = sshll.u32 [#allocation3], 4
      %s26 = int_to_ptr.vmem [resolvable:$true] %s25
      %28 = dma.hbm_to_vmem [thread:$0]  %s1, 128, %s26, [#allocation4]
    $region9: #{forward.1} parent=1 // pred_fallthru
      _
    // Predicated region
    $region10: #{forward.1} parent=1 // pred_check
      _
    $region11: #{forward.1} parent=1 // pred_check_branch
      %30 = sbr.rel (0) target = $region13
    $region12: #{forward.1} parent=1 // pred_region
      %s32 = ssub.s32 512, 512
      %33 = vsyncadd [#allocation6], %s32
      %s34 = sshll.u32 [#allocation5], 4
      %s35 = int_to_ptr.vmem [resolvable:$true] %s34
      %40 = dma.hbm_to_vmem [thread:$0]  %s2, 512, %s35, [#allocation6], 128, 128, 8
    $region13: #{forward.1} parent=1 // pred_fallthru
      _
    // Predicated region
    $region14: #{forward.1} parent=1 // pred_check
      _
    $region15: #{forward.1} parent=1 // pred_check_branch
      %42 = sbr.rel (0) target = $region17
    $region16: #{forward.1} parent=1 // pred_region
      _
    $region17: #{forward.1} parent=1 // pred_fallthru
      _
    // Predicated region
    $region18: #{forward.1} parent=1 // pred_check
      _
    $region19: #{forward.1} parent=1 // pred_check_branch
      %44 = sbr.rel (0) target = $region21
    $region20: #{forward.1} parent=1 // pred_region
      %s46 = ssub.s32 512, 512
      %47 = vsyncadd [#allocation6], %s46
      %s48 = sshll.u32 [#allocation7], 4
      %s49 = int_to_ptr.vmem [resolvable:$true] %s48
      %54 = dma.hbm_to_vmem [thread:$0]  %s4, 512, %s49, [#allocation6], 128, 128, 8
    $region21: #{forward.1} parent=1 // pred_fallthru
      _
    // Predicated region
    $region22: #{forward.1} parent=1 // pred_check
      _
    $region23: #{forward.1} parent=1 // pred_check_branch
      %56 = sbr.rel (0) target = $region25
    $region24: #{forward.1} parent=1 // pred_region
      _
    $region25: #{forward.1} parent=1 // pred_fallthru
      _
    // Predicated region
    $region26: #{forward.1} parent=1 // pred_check
      _
    $region27: #{forward.1} parent=1 // pred_check_branch
      %58 = sbr.rel (0) target = $region29
    $region28: #{forward.1} parent=1 // pred_region
      _
    $region29: #{forward.1} parent=1 // pred_fallthru
      _
    // Predicated region
    $region30: #{forward.1} parent=1 // pred_check
      _
    $region31: #{forward.1} parent=1 // pred_check_branch
      %60 = sbr.rel (0) target = $region33
    $region32: #{forward.1} parent=1 // pred_region
      %s62 = ssub.s32 4096, 4096
      %63 = vsyncadd [#allocation9], %s62
      %s64 = sshll.u32 [#allocation8], 4
      %s65 = int_to_ptr.vmem [resolvable:$true] %s64
      %70 = dma.hbm_to_vmem [thread:$0]  %s7, 4096, %s65, [#allocation9], 128, 128, 8
    $region33: #{forward.1} parent=1 // pred_fallthru
      _
    // Predicated region
    $region34: #{forward.1} parent=1 // pred_check
      _
    $region35: #{forward.1} parent=1 // pred_check_branch
      %72 = sbr.rel (0) target = $region37
    $region36: #{forward.1} parent=1 // pred_region
      _
    $region37: #{forward.1} parent=1 // pred_fallthru
      _
    // Predicated region
    $region38: #{forward.1} parent=1 // pred_check
      _
    $region39: #{forward.1} parent=1 // pred_check_branch
      %74 = sbr.rel (0) target = $region41
    $region40: #{forward.1} parent=1 // pred_region
      %75 = dma.done [#allocation4], 128
    $region41: #{forward.1} parent=1 // pred_fallthru
      _
    // Predicated region
    $region42: #{forward.1} parent=1 // pred_check
      _
    $region43: #{forward.1} parent=1 // pred_check_branch
      %77 = sbr.rel (0) target = $region45
    $region44: #{forward.1} parent=1 // pred_region
      %78 = dma.done [#allocation6], 512
    $region45: #{forward.1} parent=1 // pred_fallthru
      _
    // Predicated region
    $region46: #{forward.1} parent=1 // pred_check
      _
    $region47: #{forward.1} parent=1 // pred_check_branch
      %80 = sbr.rel (0) target = $region49
    $region48: #{forward.1} parent=1 // pred_region
      %81 = dma.done [#allocation6], 512
    $region49: #{forward.1} parent=1 // pred_fallthru
      _
    // Predicated region
    $region50: #{forward.1} parent=1 // pred_check
      _
    $region51: #{forward.1} parent=1 // pred_check_branch
      %83 = sbr.rel (0) target = $region53
    $region52: #{forward.1} parent=1 // pred_region
      %84 = dma.done [#allocation9], 4096
    $region53: #{forward.1} parent=1 // pred_fallthru
      _
    %v85 = vld [vmem:[#allocation3] sm:$0xff]
    %v86 = vld [vmem:[#allocation5] sm:$0xff]
    %v87 = vld [vmem:[#allocation5 + $0x8] sm:$0xff]
    %v88 = vld [vmem:[#allocation5 + $0x10] sm:$0xff]
    %v89 = vld [vmem:[#allocation5 + $0x18] sm:$0xff]
    %v90 = vld [vmem:[%s3] sm:$0x1]
    %v91 = vld [vmem:[#allocation7] sm:$0xff]
    %v92 = vld [vmem:[#allocation7 + $0x8] sm:$0xff]
    %v93 = vld [vmem:[#allocation7 + $0x10] sm:$0xff]
    %v94 = vld [vmem:[#allocation7 + $0x18] sm:$0xff]
    %v95 = vld [vmem:[%s5] sm:$0xff]
    %v96 = vld [vmem:[%s5 + $0x8] sm:$0xff]
    %v97 = vld [vmem:[%s5 + $0x10] sm:$0xff]
    %v98 = vld [vmem:[%s5 + $0x18] sm:$0xff]
    %v99 = vld [vmem:[%s6] sm:$0x1]
    %v100 = vld [vmem:[%s0] sm:$0xff]
    %v102 = vlaneseq
    %v103 = vshrl.u32 %v102, 7
    %v104 = vsub.s32 0, %v103
    %v105 = vrot.slane %v90, %v104
    %vm107 = vcmask 64512
    %v109 = vsel %vm107, %v100, 0
    %111 = vmatprep.subr.mxu0 0.0
    %112 = vmatpush1.msra.mxu0 %v85
    %113 = vmatprep.subr.mxu0 0.0
    %114 = vmatpush1.msra.mxu0 0.0
    %115 = vmatprep.subr.mxu0 0.0
    %116 = vmatpush1.msra.mxu0 0.0
    %117 = vmatprep.subr.mxu0 0.0
    %118 = vmatpush1.msra.mxu0 0.0
    %119 = vmatprep.subr.mxu0 0.0
    %120 = vmatpush1.msra.mxu0 0.0
    %121 = vmatprep.subr.mxu0 0.0
    %122 = vmatpush1.msra.mxu0 0.0
    %123 = vmatprep.subr.mxu0 0.0
    %124 = vmatpush1.msra.mxu0 0.0
    %125 = vmatprep.subr.mxu0 0.0
    %126 = vmatpush1.msra.mxu0 0.0
    %127 = vmatprep.subr.mxu0 0.0
    %128 = vmatpush1.msra.mxu0 0.0
    %129 = vmatprep.subr.mxu0 0.0
    %130 = vmatpush1.msra.mxu0 0.0
    %131 = vmatprep.subr.mxu0 0.0
    %132 = vmatpush1.msra.mxu0 0.0
    %133 = vmatprep.subr.mxu0 0.0
    %134 = vmatpush1.msra.mxu0 0.0
    %135 = vmatprep.subr.mxu0 0.0
    %136 = vmatpush1.msra.mxu0 0.0
    %137 = vmatprep.subr.mxu0 0.0
    %138 = vmatpush1.msra.mxu0 0.0
    %139 = vmatprep.subr.mxu0 0.0
    %140 = vmatpush1.msra.mxu0 0.0
    %141 = vmatprep.subr.mxu0 0.0
    %142 = vmatpush1.msra.mxu0 0.0
    %143 = vmatprep.subr.mxu0 0.0
    %144 = vmatpush1.msra.mxu0 0.0
    %145 = vmatprep.subr.mxu0 0.0
    %146 = vmatpush1.msra.mxu0 0.0
    %147 = vmatprep.subr.mxu0 0.0
    %148 = vmatpush1.msra.mxu0 0.0
    %149 = vmatprep.subr.mxu0 0.0
    %150 = vmatpush1.msra.mxu0 0.0
    %151 = vmatprep.subr.mxu0 0.0
    %152 = vmatpush1.msra.mxu0 0.0
    %153 = vmatprep.subr.mxu0 0.0
    %154 = vmatpush1.msra.mxu0 0.0
    %155 = vmatprep.subr.mxu0 0.0
    %156 = vmatpush1.msra.mxu0 0.0
    %157 = vmatprep.subr.mxu0 0.0
    %158 = vmatpush1.msra.mxu0 0.0
    %159 = vmatprep.subr.mxu0 0.0
    %160 = vmatpush1.msra.mxu0 0.0
    %161 = vmatprep.subr.mxu0 0.0
    %162 = vmatpush1.msra.mxu0 0.0
    %163 = vmatprep.subr.mxu0 0.0
    %164 = vmatpush1.msra.mxu0 0.0
    %165 = vmatprep.subr.mxu0 0.0
    %166 = vmatpush1.msra.mxu0 0.0
    %167 = vmatprep.subr.mxu0 0.0
    %168 = vmatpush1.msra.mxu0 0.0
    %169 = vmatprep.subr.mxu0 0.0
    %170 = vmatpush1.msra.mxu0 0.0
    %171 = vmatprep.subr.mxu0 0.0
    %172 = vmatpush1.msra.mxu0 0.0
    %173 = vmatprep.subr.mxu0 0.0
    %174 = vmatpush1.msra.mxu0 0.0
    %175 = vmatprep.mubr.f32.mxu0 0.0
    %176 = vmatmul.mubr.f32.gmra.mrb[0].mxu0 %v109
    %v177 = vpop.f32.mrb[0].mxu0
    %v178 = vadd.f32 %v105, %v177
    %v179 = vpop.f32.mrb[0].mxu0
    %180 = vdwg.mxu0
    %v181 = vlaneseq
    %v182 = vand.u32 %v181, 127
    %vm183 = vcmp.ge.s32.totalorder %v182, 64
    %vm184 = vcmp.lt.s32.totalorder %v182, 96
    %vm185 = vmand %vm183, %vm184
    %v186 = vsel %vm185, 1.0, 0.5
    %vm187 = vcmask 261120
    %v189 = vsel %vm187, 0.0, 0
    %191 = vmatprep.subr.mxu0 0.0
    %192 = vmatpush1.msra.mxu0 %v86
    %193 = vmatprep.subr.mxu0 0.0
    %194 = vmatpush1.msra.mxu0 %v87
    %195 = vmatprep.subr.mxu0 0.0
    %196 = vmatpush1.msra.mxu0 %v88
    %197 = vmatprep.subr.mxu0 0.0
    %198 = vmatpush1.msra.mxu0 %v89
    %199 = vmatprep.subr.mxu0 0.0
    %200 = vmatpush1.msra.mxu0 0.0
    %201 = vmatprep.subr.mxu0 0.0
    %202 = vmatpush1.msra.mxu0 0.0
    %203 = vmatprep.subr.mxu0 0.0
    %204 = vmatpush1.msra.mxu0 0.0
    %205 = vmatprep.subr.mxu0 0.0
    %206 = vmatpush1.msra.mxu0 0.0
    %207 = vmatprep.subr.mxu0 0.0
    %208 = vmatpush1.msra.mxu0 0.0
    %209 = vmatprep.subr.mxu0 0.0
    %210 = vmatpush1.msra.mxu0 0.0
    %211 = vmatprep.subr.mxu0 0.0
    %212 = vmatpush1.msra.mxu0 0.0
    %213 = vmatprep.subr.mxu0 0.0
    %214 = vmatpush1.msra.mxu0 0.0
    %215 = vmatprep.subr.mxu0 0.0
    %216 = vmatpush1.msra.mxu0 0.0
    %217 = vmatprep.subr.mxu0 0.0
    %218 = vmatpush1.msra.mxu0 0.0
    %219 = vmatprep.subr.mxu0 0.0
    %220 = vmatpush1.msra.mxu0 0.0
    %221 = vmatprep.subr.mxu0 0.0
    %222 = vmatpush1.msra.mxu0 0.0
    %223 = vmatprep.subr.mxu0 0.0
    %224 = vmatpush1.msra.mxu0 0.0
    %225 = vmatprep.subr.mxu0 0.0
    %226 = vmatpush1.msra.mxu0 0.0
    %227 = vmatprep.subr.mxu0 0.0
    %228 = vmatpush1.msra.mxu0 0.0
    %229 = vmatprep.subr.mxu0 0.0
    %230 = vmatpush1.msra.mxu0 0.0
    %231 = vmatprep.subr.mxu0 0.0
    %232 = vmatpush1.msra.mxu0 0.0
    %233 = vmatprep.subr.mxu0 0.0
    %234 = vmatpush1.msra.mxu0 0.0
    %235 = vmatprep.subr.mxu0 0.0
    %236 = vmatpush1.msra.mxu0 0.0
    %237 = vmatprep.subr.mxu0 0.0
    %238 = vmatpush1.msra.mxu0 0.0
    %239 = vmatprep.subr.mxu0 0.0
    %240 = vmatpush1.msra.mxu0 0.0
    %241 = vmatprep.subr.mxu0 0.0
    %242 = vmatpush1.msra.mxu0 0.0
    %243 = vmatprep.subr.mxu0 0.0
    %244 = vmatpush1.msra.mxu0 0.0
    %245 = vmatprep.subr.mxu0 0.0
    %246 = vmatpush1.msra.mxu0 0.0
    %247 = vmatprep.subr.mxu0 0.0
    %248 = vmatpush1.msra.mxu0 0.0
    %249 = vmatprep.subr.mxu0 0.0
    %250 = vmatpush1.msra.mxu0 0.0
    %251 = vmatprep.subr.mxu0 0.0
    %252 = vmatpush1.msra.mxu0 0.0
    %253 = vmatprep.subr.mxu0 0.0
    %254 = vmatpush1.msra.mxu0 0.0
    %255 = vmatprep.mubr.f32.mxu0 0.0
    %256 = vmatmul.mubr.f32.gmra.mrb[0].mxu0 %v189
    %v257 = vpop.f32.mrb[0].mxu0
    %v258 = vadd.f32 0.0, %v257
    %v259 = vpop.f32.mrb[0].mxu0
    %260 = vdwg.mxu0
    %v261 = vadd.f32 %v178, %v258
    %v262 = vmul.f32 %v261, %v186
    %v263 = vtanh.pop %v262
    %v264 = vmul.f32 %v263, 0.5
    %v265 = vadd.f32 %v264, 0.5
    %v266 = vmul.f32 %v265, 0.0
    %268 = vrot.lane.b32.xlu0 %v263, 64
    %v269 = vpop.permute.xlu0 %268
    %v271 = vmul.f32 %v265, %v269
    %273 = vrot.lane.b32.xlu0 %v271, 32
    %v274 = vpop.permute.xlu0 %273
    %v276 = vadd.f32 %v266, %v274
    %v277 = vtanh.pop %v276
    %279 = vrot.lane.b32.xlu0 %v277, 64
    %v280 = vpop.permute.xlu0 %279
    %v282 = vmul.f32 %v265, %v280
    %v284 = vlaneseq
    %v285 = vshrl.u32 %v284, 7
    %v286 = vsub.s32 0, %v285
    %v287 = vrot.slane %v99, %v286
    %289 = vmatprep.subr.mxu0 0.0
    %290 = vmatpush1.msra.mxu0 %v95
    %291 = vmatprep.subr.mxu0 0.0
    %292 = vmatpush1.msra.mxu0 %v96
    %293 = vmatprep.subr.mxu0 0.0
    %294 = vmatpush1.msra.mxu0 %v97
    %295 = vmatprep.subr.mxu0 0.0
    %296 = vmatpush1.msra.mxu0 %v98
    %297 = vmatprep.subr.mxu0 0.0
    %298 = vmatpush1.msra.mxu0 0.0
    %299 = vmatprep.subr.mxu0 0.0
    %300 = vmatpush1.msra.mxu0 0.0
    %301 = vmatprep.subr.mxu0 0.0
    %302 = vmatpush1.msra.mxu0 0.0
    %303 = vmatprep.subr.mxu0 0.0
    %304 = vmatpush1.msra.mxu0 0.0
    %305 = vmatprep.subr.mxu0 0.0
    %306 = vmatpush1.msra.mxu0 0.0
    %307 = vmatprep.subr.mxu0 0.0
    %308 = vmatpush1.msra.mxu0 0.0
    %309 = vmatprep.subr.mxu0 0.0
    %310 = vmatpush1.msra.mxu0 0.0
    %311 = vmatprep.subr.mxu0 0.0
    %312 = vmatpush1.msra.mxu0 0.0
    %313 = vmatprep.subr.mxu0 0.0
    %314 = vmatpush1.msra.mxu0 0.0
    %315 = vmatprep.subr.mxu0 0.0
    %316 = vmatpush1.msra.mxu0 0.0
    %317 = vmatprep.subr.mxu0 0.0
    %318 = vmatpush1.msra.mxu0 0.0
    %319 = vmatprep.subr.mxu0 0.0
    %320 = vmatpush1.msra.mxu0 0.0
    %321 = vmatprep.subr.mxu0 0.0
    %322 = vmatpush1.msra.mxu0 0.0
    %323 = vmatprep.subr.mxu0 0.0
    %324 = vmatpush1.msra.mxu0 0.0
    %325 = vmatprep.subr.mxu0 0.0
    %326 = vmatpush1.msra.mxu0 0.0
    %327 = vmatprep.subr.mxu0 0.0
    %328 = vmatpush1.msra.mxu0 0.0
    %329 = vmatprep.subr.mxu0 0.0
    %330 = vmatpush1.msra.mxu0 0.0
    %331 = vmatprep.subr.mxu0 0.0
    %332 = vmatpush1.msra.mxu0 0.0
    %333 = vmatprep.subr.mxu0 0.0
    %334 = vmatpush1.msra.mxu0 0.0
    %335 = vmatprep.subr.mxu0 0.0
    %336 = vmatpush1.msra.mxu0 0.0
    %337 = vmatprep.subr.mxu0 0.0
    %338 = vmatpush1.msra.mxu0 0.0
    %339 = vmatprep.subr.mxu0 0.0
    %340 = vmatpush1.msra.mxu0 0.0
    %341 = vmatprep.subr.mxu0 0.0
    %342 = vmatpush1.msra.mxu0 0.0
    %343 = vmatprep.subr.mxu0 0.0
    %344 = vmatpush1.msra.mxu0 0.0
    %345 = vmatprep.subr.mxu0 0.0
    %346 = vmatpush1.msra.mxu0 0.0
    %347 = vmatprep.subr.mxu0 0.0
    %348 = vmatpush1.msra.mxu0 0.0
    %349 = vmatprep.subr.mxu0 0.0
    %350 = vmatpush1.msra.mxu0 0.0
    %351 = vmatprep.subr.mxu0 0.0
    %352 = vmatpush1.msra.mxu0 0.0
    %353 = vmatprep.mubr.f32.mxu0 0.0
    %354 = vmatmul.mubr.f32.gmra.mrb[0].mxu0 %v189
    %v355 = vpop.f32.mrb[0].mxu0
    %v356 = vadd.f32 %v287, %v355
    %v357 = vpop.f32.mrb[0].mxu0
    %358 = vdwg.mxu0
    %360 = vrot.lane.b32.xlu0 %v282, 32
    %v361 = vpop.permute.xlu0 %360
    %v362 = vsel %vm187, %v361, 0
    %364 = vmatprep.subr.mxu0 0.0
    %365 = vmatpush1.msra.mxu0 %v91
    %366 = vmatprep.subr.mxu0 0.0
    %367 = vmatpush1.msra.mxu0 %v92
    %368 = vmatprep.subr.mxu0 0.0
    %369 = vmatpush1.msra.mxu0 %v93
    %370 = vmatprep.subr.mxu0 0.0
    %371 = vmatpush1.msra.mxu0 %v94
    %372 = vmatprep.subr.mxu0 0.0
    %373 = vmatpush1.msra.mxu0 0.0
    %374 = vmatprep.subr.mxu0 0.0
    %375 = vmatpush1.msra.mxu0 0.0
    %376 = vmatprep.subr.mxu0 0.0
    %377 = vmatpush1.msra.mxu0 0.0
    %378 = vmatprep.subr.mxu0 0.0
    %379 = vmatpush1.msra.mxu0 0.0
    %380 = vmatprep.subr.mxu0 0.0
    %381 = vmatpush1.msra.mxu0 0.0
    %382 = vmatprep.subr.mxu0 0.0
    %383 = vmatpush1.msra.mxu0 0.0
    %384 = vmatprep.subr.mxu0 0.0
    %385 = vmatpush1.msra.mxu0 0.0
    %386 = vmatprep.subr.mxu0 0.0
    %387 = vmatpush1.msra.mxu0 0.0
    %388 = vmatprep.subr.mxu0 0.0
    %389 = vmatpush1.msra.mxu0 0.0
    %390 = vmatprep.subr.mxu0 0.0
    %391 = vmatpush1.msra.mxu0 0.0
    %392 = vmatprep.subr.mxu0 0.0
    %393 = vmatpush1.msra.mxu0 0.0
    %394 = vmatprep.subr.mxu0 0.0
    %395 = vmatpush1.msra.mxu0 0.0
    %396 = vmatprep.subr.mxu0 0.0
    %397 = vmatpush1.msra.mxu0 0.0
    %398 = vmatprep.subr.mxu0 0.0
    %399 = vmatpush1.msra.mxu0 0.0
    %400 = vmatprep.subr.mxu0 0.0
    %401 = vmatpush1.msra.mxu0 0.0
    %402 = vmatprep.subr.mxu0 0.0
    %403 = vmatpush1.msra.mxu0 0.0
    %404 = vmatprep.subr.mxu0 0.0
    %405 = vmatpush1.msra.mxu0 0.0
    %406 = vmatprep.subr.mxu0 0.0
    %407 = vmatpush1.msra.mxu0 0.0
    %408 = vmatprep.subr.mxu0 0.0
    %409 = vmatpush1.msra.mxu0 0.0
    %410 = vmatprep.subr.mxu0 0.0
    %411 = vmatpush1.msra.mxu0 0.0
    %412 = vmatprep.subr.mxu0 0.0
    %413 = vmatpush1.msra.mxu0 0.0
    %414 = vmatprep.subr.mxu0 0.0
    %415 = vmatpush1.msra.mxu0 0.0
    %416 = vmatprep.subr.mxu0 0.0
    %417 = vmatpush1.msra.mxu0 0.0
    %418 = vmatprep.subr.mxu0 0.0
    %419 = vmatpush1.msra.mxu0 0.0
    %420 = vmatprep.subr.mxu0 0.0
    %421 = vmatpush1.msra.mxu0 0.0
    %422 = vmatprep.subr.mxu0 0.0
    %423 = vmatpush1.msra.mxu0 0.0
    %424 = vmatprep.subr.mxu0 0.0
    %425 = vmatpush1.msra.mxu0 0.0
    %426 = vmatprep.subr.mxu0 0.0
    %427 = vmatpush1.msra.mxu0 0.0
    %428 = vmatprep.mubr.f32.mxu0 0.0
    %429 = vmatmul.mubr.f32.gmra.mrb[0].mxu0 %v362
    %v430 = vpop.f32.mrb[0].mxu0
    %v431 = vadd.f32 0.0, %v430
    %v432 = vpop.f32.mrb[0].mxu0
    %433 = vdwg.mxu0
    %v434 = vadd.f32 %v356, %v431
    %v435 = vmul.f32 %v434, %v186
    %v436 = vtanh.pop %v435
    %v437 = vmul.f32 %v436, 0.5
    %v438 = vadd.f32 %v437, 0.5
    %v439 = vmul.f32 %v438, 0.0
    %441 = vrot.lane.b32.xlu0 %v436, 64
    %v442 = vpop.permute.xlu0 %441
    %v444 = vmul.f32 %v438, %v442
    %446 = vrot.lane.b32.xlu0 %v444, 32
    %v447 = vpop.permute.xlu0 %446
    %v449 = vadd.f32 %v439, %v447
    %v450 = vtanh.pop %v449
    %452 = vrot.lane.b32.xlu0 %v450, 64
    %v453 = vpop.permute.xlu0 %452
    %v455 = vmul.f32 %v438, %v453
    %457 = vrot.lane.b32.xlu0 %v455, 32
    %v458 = vpop.permute.xlu0 %457
    %460 = vst.msk [vmem:[#allocation2] sm:$0xff] %vm187, %v458
    %461 = vmatprep.subr.mxu0 0.0
    %462 = vmatpush1.msra.mxu0 %v86
    %463 = vmatprep.subr.mxu0 0.0
    %464 = vmatpush1.msra.mxu0 %v87
    %465 = vmatprep.subr.mxu0 0.0
    %466 = vmatpush1.msra.mxu0 %v88
    %467 = vmatprep.subr.mxu0 0.0
    %468 = vmatpush1.msra.mxu0 %v89
    %469 = vmatprep.subr.mxu0 0.0
    %470 = vmatpush1.msra.mxu0 0.0
    %471 = vmatprep.subr.mxu0 0.0
    %472 = vmatpush1.msra.mxu0 0.0
    %473 = vmatprep.subr.mxu0 0.0
    %474 = vmatpush1.msra.mxu0 0.0
    %475 = vmatprep.subr.mxu0 0.0
    %476 = vmatpush1.msra.mxu0 0.0
    %477 = vmatprep.subr.mxu0 0.0
    %478 = vmatpush1.msra.mxu0 0.0
    %479 = vmatprep.subr.mxu0 0.0
    %480 = vmatpush1.msra.mxu0 0.0
    %481 = vmatprep.subr.mxu0 0.0
    %482 = vmatpush1.msra.mxu0 0.0
    %483 = vmatprep.subr.mxu0 0.0
    %484 = vmatpush1.msra.mxu0 0.0
    %485 = vmatprep.subr.mxu0 0.0
    %486 = vmatpush1.msra.mxu0 0.0
    %487 = vmatprep.subr.mxu0 0.0
    %488 = vmatpush1.msra.mxu0 0.0
    %489 = vmatprep.subr.mxu0 0.0
    %490 = vmatpush1.msra.mxu0 0.0
    %491 = vmatprep.subr.mxu0 0.0
    %492 = vmatpush1.msra.mxu0 0.0
    %493 = vmatprep.subr.mxu0 0.0
    %494 = vmatpush1.msra.mxu0 0.0
    %495 = vmatprep.subr.mxu0 0.0
    %496 = vmatpush1.msra.mxu0 0.0
    %497 = vmatprep.subr.mxu0 0.0
    %498 = vmatpush1.msra.mxu0 0.0
    %499 = vmatprep.subr.mxu0 0.0
    %500 = vmatpush1.msra.mxu0 0.0
    %501 = vmatprep.subr.mxu0 0.0
    %502 = vmatpush1.msra.mxu0 0.0
    %503 = vmatprep.subr.mxu0 0.0
    %504 = vmatpush1.msra.mxu0 0.0
    %505 = vmatprep.subr.mxu0 0.0
    %506 = vmatpush1.msra.mxu0 0.0
    %507 = vmatprep.subr.mxu0 0.0
    %508 = vmatpush1.msra.mxu0 0.0
    %509 = vmatprep.subr.mxu0 0.0
    %510 = vmatpush1.msra.mxu0 0.0
    %511 = vmatprep.subr.mxu0 0.0
    %512 = vmatpush1.msra.mxu0 0.0
    %513 = vmatprep.subr.mxu0 0.0
    %514 = vmatpush1.msra.mxu0 0.0
    %515 = vmatprep.subr.mxu0 0.0
    %516 = vmatpush1.msra.mxu0 0.0
    %517 = vmatprep.subr.mxu0 0.0
    %518 = vmatpush1.msra.mxu0 0.0
    %519 = vmatprep.subr.mxu0 0.0
    %520 = vmatpush1.msra.mxu0 0.0
    %521 = vmatprep.subr.mxu0 0.0
    %522 = vmatpush1.msra.mxu0 0.0
    %523 = vmatprep.subr.mxu0 0.0
    %524 = vmatpush1.msra.mxu0 0.0
    %525 = vmatprep.mubr.f32.mxu0 0.0
    %526 = vmatmul.mubr.f32.gmra.mrb[0].mxu0 %v362
    %v527 = vpop.f32.mrb[0].mxu0
    %v528 = vadd.f32 0.0, %v527
    %v529 = vpop.f32.mrb[0].mxu0
    %530 = vdwg.mxu0
    %v531 = vadd.f32 %v178, %v528
    %v532 = vmul.f32 %v531, %v186
    %v533 = vtanh.pop %v532
    %v534 = vmul.f32 %v533, 0.5
    %v535 = vadd.f32 %v534, 0.5
    %v536 = vmul.f32 %v535, %v276
    %538 = vrot.lane.b32.xlu0 %v533, 64
    %v539 = vpop.permute.xlu0 %538
    %v541 = vmul.f32 %v535, %v539
    %543 = vrot.lane.b32.xlu0 %v541, 32
    %v544 = vpop.permute.xlu0 %543
    %v546 = vadd.f32 %v536, %v544
    %v547 = vtanh.pop %v546
    %549 = vrot.lane.b32.xlu0 %v547, 64
    %v550 = vpop.permute.xlu0 %549
    %v552 = vmul.f32 %v535, %v550
    %v553 = vsel %vm187, %v458, 0
    %555 = vmatprep.subr.mxu0 0.0
    %556 = vmatpush1.msra.mxu0 %v95
    %557 = vmatprep.subr.mxu0 0.0
    %558 = vmatpush1.msra.mxu0 %v96
    %559 = vmatprep.subr.mxu0 0.0
    %560 = vmatpush1.msra.mxu0 %v97
    %561 = vmatprep.subr.mxu0 0.0
    %562 = vmatpush1.msra.mxu0 %v98
    %563 = vmatprep.subr.mxu0 0.0
    %564 = vmatpush1.msra.mxu0 0.0
    %565 = vmatprep.subr.mxu0 0.0
    %566 = vmatpush1.msra.mxu0 0.0
    %567 = vmatprep.subr.mxu0 0.0
    %568 = vmatpush1.msra.mxu0 0.0
    %569 = vmatprep.subr.mxu0 0.0
    %570 = vmatpush1.msra.mxu0 0.0
    %571 = vmatprep.subr.mxu0 0.0
    %572 = vmatpush1.msra.mxu0 0.0
    %573 = vmatprep.subr.mxu0 0.0
    %574 = vmatpush1.msra.mxu0 0.0
    %575 = vmatprep.subr.mxu0 0.0
    %576 = vmatpush1.msra.mxu0 0.0
    %577 = vmatprep.subr.mxu0 0.0
    %578 = vmatpush1.msra.mxu0 0.0
    %579 = vmatprep.subr.mxu0 0.0
    %580 = vmatpush1.msra.mxu0 0.0
    %581 = vmatprep.subr.mxu0 0.0
    %582 = vmatpush1.msra.mxu0 0.0
    %583 = vmatprep.subr.mxu0 0.0
    %584 = vmatpush1.msra.mxu0 0.0
    %585 = vmatprep.subr.mxu0 0.0
    %586 = vmatpush1.msra.mxu0 0.0
    %587 = vmatprep.subr.mxu0 0.0
    %588 = vmatpush1.msra.mxu0 0.0
    %589 = vmatprep.subr.mxu0 0.0
    %590 = vmatpush1.msra.mxu0 0.0
    %591 = vmatprep.subr.mxu0 0.0
    %592 = vmatpush1.msra.mxu0 0.0
    %593 = vmatprep.subr.mxu0 0.0
    %594 = vmatpush1.msra.mxu0 0.0
    %595 = vmatprep.subr.mxu0 0.0
    %596 = vmatpush1.msra.mxu0 0.0
    %597 = vmatprep.subr.mxu0 0.0
    %598 = vmatpush1.msra.mxu0 0.0
    %599 = vmatprep.subr.mxu0 0.0
    %600 = vmatpush1.msra.mxu0 0.0
    %601 = vmatprep.subr.mxu0 0.0
    %602 = vmatpush1.msra.mxu0 0.0
    %603 = vmatprep.subr.mxu0 0.0
    %604 = vmatpush1.msra.mxu0 0.0
    %605 = vmatprep.subr.mxu0 0.0
    %606 = vmatpush1.msra.mxu0 0.0
    %607 = vmatprep.subr.mxu0 0.0
    %608 = vmatpush1.msra.mxu0 0.0
    %609 = vmatprep.subr.mxu0 0.0
    %610 = vmatpush1.msra.mxu0 0.0
    %611 = vmatprep.subr.mxu0 0.0
    %612 = vmatpush1.msra.mxu0 0.0
    %613 = vmatprep.subr.mxu0 0.0
    %614 = vmatpush1.msra.mxu0 0.0
    %615 = vmatprep.subr.mxu0 0.0
    %616 = vmatpush1.msra.mxu0 0.0
    %617 = vmatprep.subr.mxu0 0.0
    %618 = vmatpush1.msra.mxu0 0.0
    %619 = vmatprep.mubr.f32.mxu0 0.0
    %620 = vmatmul.mubr.f32.gmra.mrb[0].mxu0 %v553
    %v621 = vpop.f32.mrb[0].mxu0
    %v622 = vadd.f32 %v287, %v621
    %v623 = vpop.f32.mrb[0].mxu0
    %624 = vdwg.mxu0
    %626 = vrot.lane.b32.xlu0 %v552, 32
    %v627 = vpop.permute.xlu0 %626
    %v628 = vsel %vm187, %v627, 0
    %630 = vmatprep.subr.mxu0 0.0
    %631 = vmatpush1.msra.mxu0 %v91
    %632 = vmatprep.subr.mxu0 0.0
    %633 = vmatpush1.msra.mxu0 %v92
    %634 = vmatprep.subr.mxu0 0.0
    %635 = vmatpush1.msra.mxu0 %v93
    %636 = vmatprep.subr.mxu0 0.0
    %637 = vmatpush1.msra.mxu0 %v94
    %638 = vmatprep.subr.mxu0 0.0
    %639 = vmatpush1.msra.mxu0 0.0
    %640 = vmatprep.subr.mxu0 0.0
    %641 = vmatpush1.msra.mxu0 0.0
    %642 = vmatprep.subr.mxu0 0.0
    %643 = vmatpush1.msra.mxu0 0.0
    %644 = vmatprep.subr.mxu0 0.0
    %645 = vmatpush1.msra.mxu0 0.0
    %646 = vmatprep.subr.mxu0 0.0
    %647 = vmatpush1.msra.mxu0 0.0
    %648 = vmatprep.subr.mxu0 0.0
    %649 = vmatpush1.msra.mxu0 0.0
    %650 = vmatprep.subr.mxu0 0.0
    %651 = vmatpush1.msra.mxu0 0.0
    %652 = vmatprep.subr.mxu0 0.0
    %653 = vmatpush1.msra.mxu0 0.0
    %654 = vmatprep.subr.mxu0 0.0
    %655 = vmatpush1.msra.mxu0 0.0
    %656 = vmatprep.subr.mxu0 0.0
    %657 = vmatpush1.msra.mxu0 0.0
    %658 = vmatprep.subr.mxu0 0.0
    %659 = vmatpush1.msra.mxu0 0.0
    %660 = vmatprep.subr.mxu0 0.0
    %661 = vmatpush1.msra.mxu0 0.0
    %662 = vmatprep.subr.mxu0 0.0
    %663 = vmatpush1.msra.mxu0 0.0
    %664 = vmatprep.subr.mxu0 0.0
    %665 = vmatpush1.msra.mxu0 0.0
    %666 = vmatprep.subr.mxu0 0.0
    %667 = vmatpush1.msra.mxu0 0.0
    %668 = vmatprep.subr.mxu0 0.0
    %669 = vmatpush1.msra.mxu0 0.0
    %670 = vmatprep.subr.mxu0 0.0
    %671 = vmatpush1.msra.mxu0 0.0
    %672 = vmatprep.subr.mxu0 0.0
    %673 = vmatpush1.msra.mxu0 0.0
    %674 = vmatprep.subr.mxu0 0.0
    %675 = vmatpush1.msra.mxu0 0.0
    %676 = vmatprep.subr.mxu0 0.0
    %677 = vmatpush1.msra.mxu0 0.0
    %678 = vmatprep.subr.mxu0 0.0
    %679 = vmatpush1.msra.mxu0 0.0
    %680 = vmatprep.subr.mxu0 0.0
    %681 = vmatpush1.msra.mxu0 0.0
    %682 = vmatprep.subr.mxu0 0.0
    %683 = vmatpush1.msra.mxu0 0.0
    %684 = vmatprep.subr.mxu0 0.0
    %685 = vmatpush1.msra.mxu0 0.0
    %686 = vmatprep.subr.mxu0 0.0
    %687 = vmatpush1.msra.mxu0 0.0
    %688 = vmatprep.subr.mxu0 0.0
    %689 = vmatpush1.msra.mxu0 0.0
    %690 = vmatprep.subr.mxu0 0.0
    %691 = vmatpush1.msra.mxu0 0.0
    %692 = vmatprep.subr.mxu0 0.0
    %693 = vmatpush1.msra.mxu0 0.0
    %694 = vmatprep.mubr.f32.mxu0 0.0
    %695 = vmatmul.mubr.f32.gmra.mrb[0].mxu0 %v628
    %v696 = vpop.f32.mrb[0].mxu0
    %v697 = vadd.f32 0.0, %v696
    %v698 = vpop.f32.mrb[0].mxu0
    %699 = vdwg.mxu0
    %v700 = vadd.f32 %v622, %v697
    %v701 = vmul.f32 %v700, %v186
    %v702 = vtanh.pop %v701
    %v703 = vmul.f32 %v702, 0.5
    %v704 = vadd.f32 %v703, 0.5
    %v705 = vmul.f32 %v704, %v449
    %707 = vrot.lane.b32.xlu0 %v702, 64
    %v708 = vpop.permute.xlu0 %707
    %v710 = vmul.f32 %v704, %v708
    %712 = vrot.lane.b32.xlu0 %v710, 32
    %v713 = vpop.permute.xlu0 %712
    %v715 = vadd.f32 %v705, %v713
    %v716 = vtanh.pop %v715
    %718 = vrot.lane.b32.xlu0 %v716, 64
    %v719 = vpop.permute.xlu0 %718
    %v721 = vmul.f32 %v704, %v719
    %723 = vrot.lane.b32.xlu0 %v721, 64
    %v724 = vpop.permute.xlu0 %723
    %vm726 = vcmask 523520
    %727 = vst.msk [vmem:[#allocation2] sm:$0xff] %vm726, %v724
    %728 = vmatprep.subr.mxu0 0.0
    %729 = vmatpush1.msra.mxu0 %v86
    %730 = vmatprep.subr.mxu0 0.0
    %731 = vmatpush1.msra.mxu0 %v87
    %732 = vmatprep.subr.mxu0 0.0
    %733 = vmatpush1.msra.mxu0 %v88
    %734 = vmatprep.subr.mxu0 0.0
    %735 = vmatpush1.msra.mxu0 %v89
    %736 = vmatprep.subr.mxu0 0.0
    %737 = vmatpush1.msra.mxu0 0.0
    %738 = vmatprep.subr.mxu0 0.0
    %739 = vmatpush1.msra.mxu0 0.0
    %740 = vmatprep.subr.mxu0 0.0
    %741 = vmatpush1.msra.mxu0 0.0
    %742 = vmatprep.subr.mxu0 0.0
    %743 = vmatpush1.msra.mxu0 0.0
    %744 = vmatprep.subr.mxu0 0.0
    %745 = vmatpush1.msra.mxu0 0.0
    %746 = vmatprep.subr.mxu0 0.0
    %747 = vmatpush1.msra.mxu0 0.0
    %748 = vmatprep.subr.mxu0 0.0
    %749 = vmatpush1.msra.mxu0 0.0
    %750 = vmatprep.subr.mxu0 0.0
    %751 = vmatpush1.msra.mxu0 0.0
    %752 = vmatprep.subr.mxu0 0.0
    %753 = vmatpush1.msra.mxu0 0.0
    %754 = vmatprep.subr.mxu0 0.0
    %755 = vmatpush1.msra.mxu0 0.0
    %756 = vmatprep.subr.mxu0 0.0
    %757 = vmatpush1.msra.mxu0 0.0
    %758 = vmatprep.subr.mxu0 0.0
    %759 = vmatpush1.msra.mxu0 0.0
    %760 = vmatprep.subr.mxu0 0.0
    %761 = vmatpush1.msra.mxu0 0.0
    %762 = vmatprep.subr.mxu0 0.0
    %763 = vmatpush1.msra.mxu0 0.0
    %764 = vmatprep.subr.mxu0 0.0
    %765 = vmatpush1.msra.mxu0 0.0
    %766 = vmatprep.subr.mxu0 0.0
    %767 = vmatpush1.msra.mxu0 0.0
    %768 = vmatprep.subr.mxu0 0.0
    %769 = vmatpush1.msra.mxu0 0.0
    %770 = vmatprep.subr.mxu0 0.0
    %771 = vmatpush1.msra.mxu0 0.0
    %772 = vmatprep.subr.mxu0 0.0
    %773 = vmatpush1.msra.mxu0 0.0
    %774 = vmatprep.subr.mxu0 0.0
    %775 = vmatpush1.msra.mxu0 0.0
    %776 = vmatprep.subr.mxu0 0.0
    %777 = vmatpush1.msra.mxu0 0.0
    %778 = vmatprep.subr.mxu0 0.0
    %779 = vmatpush1.msra.mxu0 0.0
    %780 = vmatprep.subr.mxu0 0.0
    %781 = vmatpush1.msra.mxu0 0.0
    %782 = vmatprep.subr.mxu0 0.0
    %783 = vmatpush1.msra.mxu0 0.0
    %784 = vmatprep.subr.mxu0 0.0
    %785 = vmatpush1.msra.mxu0 0.0
    %786 = vmatprep.subr.mxu0 0.0
    %787 = vmatpush1.msra.mxu0 0.0
    %788 = vmatprep.subr.mxu0 0.0
    %789 = vmatpush1.msra.mxu0 0.0
    %790 = vmatprep.subr.mxu0 0.0
    %791 = vmatpush1.msra.mxu0 0.0
    %792 = vmatprep.mubr.f32.mxu0 0.0
    %793 = vmatmul.mubr.f32.gmra.mrb[0].mxu0 %v628
    %v794 = vpop.f32.mrb[0].mxu0
    %v795 = vadd.f32 0.0, %v794
    %v796 = vpop.f32.mrb[0].mxu0
    %797 = vdwg.mxu0
    %v798 = vadd.f32 %v178, %v795
    %v799 = vmul.f32 %v798, %v186
    %v800 = vtanh.pop %v799
    %v801 = vmul.f32 %v800, 0.5
    %v802 = vadd.f32 %v801, 0.5
    %v803 = vmul.f32 %v802, %v546
    %805 = vrot.lane.b32.xlu0 %v800, 64
    %v806 = vpop.permute.xlu0 %805
    %v808 = vmul.f32 %v802, %v806
    %810 = vrot.lane.b32.xlu0 %v808, 32
    %v811 = vpop.permute.xlu0 %810
    %v813 = vadd.f32 %v803, %v811
    %v814 = vtanh.pop %v813
    %816 = vrot.lane.b32.xlu0 %v814, 64
    %v817 = vpop.permute.xlu0 %816
    %v819 = vmul.f32 %v802, %v817
    %820 = vrot.lane.b32.xlu0 %v721, 32
    %v821 = vpop.permute.xlu0 %820
    %v822 = vsel %vm187, %v821, 0
    %824 = vmatprep.subr.mxu0 0.0
    %825 = vmatpush1.msra.mxu0 %v95
    %826 = vmatprep.subr.mxu0 0.0
    %827 = vmatpush1.msra.mxu0 %v96
    %828 = vmatprep.subr.mxu0 0.0
    %829 = vmatpush1.msra.mxu0 %v97
    %830 = vmatprep.subr.mxu0 0.0
    %831 = vmatpush1.msra.mxu0 %v98
    %832 = vmatprep.subr.mxu0 0.0
    %833 = vmatpush1.msra.mxu0 0.0
    %834 = vmatprep.subr.mxu0 0.0
    %835 = vmatpush1.msra.mxu0 0.0
    %836 = vmatprep.subr.mxu0 0.0
    %837 = vmatpush1.msra.mxu0 0.0
    %838 = vmatprep.subr.mxu0 0.0
    %839 = vmatpush1.msra.mxu0 0.0
    %840 = vmatprep.subr.mxu0 0.0
    %841 = vmatpush1.msra.mxu0 0.0
    %842 = vmatprep.subr.mxu0 0.0
    %843 = vmatpush1.msra.mxu0 0.0
    %844 = vmatprep.subr.mxu0 0.0
    %845 = vmatpush1.msra.mxu0 0.0
    %846 = vmatprep.subr.mxu0 0.0
    %847 = vmatpush1.msra.mxu0 0.0
    %848 = vmatprep.subr.mxu0 0.0
    %849 = vmatpush1.msra.mxu0 0.0
    %850 = vmatprep.subr.mxu0 0.0
    %851 = vmatpush1.msra.mxu0 0.0
    %852 = vmatprep.subr.mxu0 0.0
    %853 = vmatpush1.msra.mxu0 0.0
    %854 = vmatprep.subr.mxu0 0.0
    %855 = vmatpush1.msra.mxu0 0.0
    %856 = vmatprep.subr.mxu0 0.0
    %857 = vmatpush1.msra.mxu0 0.0
    %858 = vmatprep.subr.mxu0 0.0
    %859 = vmatpush1.msra.mxu0 0.0
    %860 = vmatprep.subr.mxu0 0.0
    %861 = vmatpush1.msra.mxu0 0.0
    %862 = vmatprep.subr.mxu0 0.0
    %863 = vmatpush1.msra.mxu0 0.0
    %864 = vmatprep.subr.mxu0 0.0
    %865 = vmatpush1.msra.mxu0 0.0
    %866 = vmatprep.subr.mxu0 0.0
    %867 = vmatpush1.msra.mxu0 0.0
    %868 = vmatprep.subr.mxu0 0.0
    %869 = vmatpush1.msra.mxu0 0.0
    %870 = vmatprep.subr.mxu0 0.0
    %871 = vmatpush1.msra.mxu0 0.0
    %872 = vmatprep.subr.mxu0 0.0
    %873 = vmatpush1.msra.mxu0 0.0
    %874 = vmatprep.subr.mxu0 0.0
    %875 = vmatpush1.msra.mxu0 0.0
    %876 = vmatprep.subr.mxu0 0.0
    %877 = vmatpush1.msra.mxu0 0.0
    %878 = vmatprep.subr.mxu0 0.0
    %879 = vmatpush1.msra.mxu0 0.0
    %880 = vmatprep.subr.mxu0 0.0
    %881 = vmatpush1.msra.mxu0 0.0
    %882 = vmatprep.subr.mxu0 0.0
    %883 = vmatpush1.msra.mxu0 0.0
    %884 = vmatprep.subr.mxu0 0.0
    %885 = vmatpush1.msra.mxu0 0.0
    %886 = vmatprep.subr.mxu0 0.0
    %887 = vmatpush1.msra.mxu0 0.0
    %888 = vmatprep.mubr.f32.mxu0 0.0
    %889 = vmatmul.mubr.f32.gmra.mrb[0].mxu0 %v822
    %v890 = vpop.f32.mrb[0].mxu0
    %v891 = vadd.f32 %v287, %v890
    %v892 = vpop.f32.mrb[0].mxu0
    %893 = vdwg.mxu0
    %895 = vrot.lane.b32.xlu0 %v819, 32
    %v896 = vpop.permute.xlu0 %895
    %v897 = vsel %vm187, %v896, 0
    %899 = vmatprep.subr.mxu0 0.0
    %900 = vmatpush1.msra.mxu0 %v91
    %901 = vmatprep.subr.mxu0 0.0
    %902 = vmatpush1.msra.mxu0 %v92
    %903 = vmatprep.subr.mxu0 0.0
    %904 = vmatpush1.msra.mxu0 %v93
    %905 = vmatprep.subr.mxu0 0.0
    %906 = vmatpush1.msra.mxu0 %v94
    %907 = vmatprep.subr.mxu0 0.0
    %908 = vmatpush1.msra.mxu0 0.0
    %909 = vmatprep.subr.mxu0 0.0
    %910 = vmatpush1.msra.mxu0 0.0
    %911 = vmatprep.subr.mxu0 0.0
    %912 = vmatpush1.msra.mxu0 0.0
    %913 = vmatprep.subr.mxu0 0.0
    %914 = vmatpush1.msra.mxu0 0.0
    %915 = vmatprep.subr.mxu0 0.0
    %916 = vmatpush1.msra.mxu0 0.0
    %917 = vmatprep.subr.mxu0 0.0
    %918 = vmatpush1.msra.mxu0 0.0
    %919 = vmatprep.subr.mxu0 0.0
    %920 = vmatpush1.msra.mxu0 0.0
    %921 = vmatprep.subr.mxu0 0.0
    %922 = vmatpush1.msra.mxu0 0.0
    %923 = vmatprep.subr.mxu0 0.0
    %924 = vmatpush1.msra.mxu0 0.0
    %925 = vmatprep.subr.mxu0 0.0
    %926 = vmatpush1.msra.mxu0 0.0
    %927 = vmatprep.subr.mxu0 0.0
    %928 = vmatpush1.msra.mxu0 0.0
    %929 = vmatprep.subr.mxu0 0.0
    %930 = vmatpush1.msra.mxu0 0.0
    %931 = vmatprep.subr.mxu0 0.0
    %932 = vmatpush1.msra.mxu0 0.0
    %933 = vmatprep.subr.mxu0 0.0
    %934 = vmatpush1.msra.mxu0 0.0
    %935 = vmatprep.subr.mxu0 0.0
    %936 = vmatpush1.msra.mxu0 0.0
    %937 = vmatprep.subr.mxu0 0.0
    %938 = vmatpush1.msra.mxu0 0.0
    %939 = vmatprep.subr.mxu0 0.0
    %940 = vmatpush1.msra.mxu0 0.0
    %941 = vmatprep.subr.mxu0 0.0
    %942 = vmatpush1.msra.mxu0 0.0
    %943 = vmatprep.subr.mxu0 0.0
    %944 = vmatpush1.msra.mxu0 0.0
    %945 = vmatprep.subr.mxu0 0.0
    %946 = vmatpush1.msra.mxu0 0.0
    %947 = vmatprep.subr.mxu0 0.0
    %948 = vmatpush1.msra.mxu0 0.0
    %949 = vmatprep.subr.mxu0 0.0
    %950 = vmatpush1.msra.mxu0 0.0
    %951 = vmatprep.subr.mxu0 0.0
    %952 = vmatpush1.msra.mxu0 0.0
    %953 = vmatprep.subr.mxu0 0.0
    %954 = vmatpush1.msra.mxu0 0.0
    %955 = vmatprep.subr.mxu0 0.0
    %956 = vmatpush1.msra.mxu0 0.0
    %957 = vmatprep.subr.mxu0 0.0
    %958 = vmatpush1.msra.mxu0 0.0
    %959 = vmatprep.subr.mxu0 0.0
    %960 = vmatpush1.msra.mxu0 0.0
    %961 = vmatprep.subr.mxu0 0.0
    %962 = vmatpush1.msra.mxu0 0.0
    %963 = vmatprep.mubr.f32.mxu0 0.0
    %964 = vmatmul.mubr.f32.gmra.mrb[0].mxu0 %v897
    %v965 = vpop.f32.mrb[0].mxu0
    %v966 = vadd.f32 0.0, %v965
    %v967 = vpop.f32.mrb[0].mxu0
    %968 = vdwg.mxu0
    %v969 = vadd.f32 %v891, %v966
    %v970 = vmul.f32 %v969, %v186
    %v971 = vtanh.pop %v970
    %v972 = vmul.f32 %v971, 0.5
    %v973 = vadd.f32 %v972, 0.5
    %v974 = vmul.f32 %v973, %v715
    %976 = vrot.lane.b32.xlu0 %v971, 64
    %v977 = vpop.permute.xlu0 %976
    %v979 = vmul.f32 %v973, %v977
    %981 = vrot.lane.b32.xlu0 %v979, 32
    %v982 = vpop.permute.xlu0 %981
    %v984 = vadd.f32 %v974, %v982
    %v985 = vtanh.pop %v984
    %987 = vrot.lane.b32.xlu0 %v985, 64
    %v988 = vpop.permute.xlu0 %987
    %v990 = vmul.f32 %v973, %v988
    %992 = vrot.lane.b32.xlu0 %v990, 96
    %v993 = vpop.permute.xlu0 %992
    %vm995 = vcmask 785920
    %996 = vst.msk [vmem:[#allocation2] sm:$0xff] %vm995, %v993
    %997 = vmatprep.subr.mxu0 0.0
    %998 = vmatpush1.msra.mxu0 %v86
    %999 = vmatprep.subr.mxu0 0.0
    %1000 = vmatpush1.msra.mxu0 %v87
    %1001 = vmatprep.subr.mxu0 0.0
    %1002 = vmatpush1.msra.mxu0 %v88
    %1003 = vmatprep.subr.mxu0 0.0
    %1004 = vmatpush1.msra.mxu0 %v89
    %1005 = vmatprep.subr.mxu0 0.0
    %1006 = vmatpush1.msra.mxu0 0.0
    %1007 = vmatprep.subr.mxu0 0.0
    %1008 = vmatpush1.msra.mxu0 0.0
    %1009 = vmatprep.subr.mxu0 0.0
    %1010 = vmatpush1.msra.mxu0 0.0
    %1011 = vmatprep.subr.mxu0 0.0
    %1012 = vmatpush1.msra.mxu0 0.0
    %1013 = vmatprep.subr.mxu0 0.0
    %1014 = vmatpush1.msra.mxu0 0.0
    %1015 = vmatprep.subr.mxu0 0.0
    %1016 = vmatpush1.msra.mxu0 0.0
    %1017 = vmatprep.subr.mxu0 0.0
    %1018 = vmatpush1.msra.mxu0 0.0
    %1019 = vmatprep.subr.mxu0 0.0
    %1020 = vmatpush1.msra.mxu0 0.0
    %1021 = vmatprep.subr.mxu0 0.0
    %1022 = vmatpush1.msra.mxu0 0.0
    %1023 = vmatprep.subr.mxu0 0.0
    %1024 = vmatpush1.msra.mxu0 0.0
    %1025 = vmatprep.subr.mxu0 0.0
    %1026 = vmatpush1.msra.mxu0 0.0
    %1027 = vmatprep.subr.mxu0 0.0
    %1028 = vmatpush1.msra.mxu0 0.0
    %1029 = vmatprep.subr.mxu0 0.0
    %1030 = vmatpush1.msra.mxu0 0.0
    %1031 = vmatprep.subr.mxu0 0.0
    %1032 = vmatpush1.msra.mxu0 0.0
    %1033 = vmatprep.subr.mxu0 0.0
    %1034 = vmatpush1.msra.mxu0 0.0
    %1035 = vmatprep.subr.mxu0 0.0
    %1036 = vmatpush1.msra.mxu0 0.0
    %1037 = vmatprep.subr.mxu0 0.0
    %1038 = vmatpush1.msra.mxu0 0.0
    %1039 = vmatprep.subr.mxu0 0.0
    %1040 = vmatpush1.msra.mxu0 0.0
    %1041 = vmatprep.subr.mxu0 0.0
    %1042 = vmatpush1.msra.mxu0 0.0
    %1043 = vmatprep.subr.mxu0 0.0
    %1044 = vmatpush1.msra.mxu0 0.0
    %1045 = vmatprep.subr.mxu0 0.0
    %1046 = vmatpush1.msra.mxu0 0.0
    %1047 = vmatprep.subr.mxu0 0.0
    %1048 = vmatpush1.msra.mxu0 0.0
    %1049 = vmatprep.subr.mxu0 0.0
    %1050 = vmatpush1.msra.mxu0 0.0
    %1051 = vmatprep.subr.mxu0 0.0
    %1052 = vmatpush1.msra.mxu0 0.0
    %1053 = vmatprep.subr.mxu0 0.0
    %1054 = vmatpush1.msra.mxu0 0.0
    %1055 = vmatprep.subr.mxu0 0.0
    %1056 = vmatpush1.msra.mxu0 0.0
    %1057 = vmatprep.subr.mxu0 0.0
    %1058 = vmatpush1.msra.mxu0 0.0
    %1059 = vmatprep.subr.mxu0 0.0
    %1060 = vmatpush1.msra.mxu0 0.0
    %1061 = vmatprep.mubr.f32.mxu0 0.0
    %1062 = vmatmul.mubr.f32.gmra.mrb[0].mxu0 %v897
    %v1063 = vpop.f32.mrb[0].mxu0
    %v1064 = vadd.f32 0.0, %v1063
    %v1065 = vpop.f32.mrb[0].mxu0
    %1066 = vdwg.mxu0
    %v1067 = vadd.f32 %v178, %v1064
    %v1068 = vmul.f32 %v1067, %v186
    %v1069 = vtanh.pop %v1068
    %v1070 = vmul.f32 %v1069, 0.5
    %v1071 = vadd.f32 %v1070, 0.5
    %v1072 = vmul.f32 %v1071, %v813
    %1074 = vrot.lane.b32.xlu0 %v1069, 64
    %v1075 = vpop.permute.xlu0 %1074
    %v1077 = vmul.f32 %v1071, %v1075
    %1079 = vrot.lane.b32.xlu0 %v1077, 32
    %v1080 = vpop.permute.xlu0 %1079
    %v1082 = vadd.f32 %v1072, %v1080
    %v1083 = vtanh.pop %v1082
    %1085 = vrot.lane.b32.xlu0 %v1083, 64
    %v1086 = vpop.permute.xlu0 %1085
    %v1088 = vmul.f32 %v1071, %v1086
    %1089 = vrot.lane.b32.xlu0 %v990, 32
    %v1090 = vpop.permute.xlu0 %1089
    %v1091 = vsel %vm187, %v1090, 0
    %1093 = vmatprep.subr.mxu0 0.0
    %1094 = vmatpush1.msra.mxu0 %v95
    %1095 = vmatprep.subr.mxu0 0.0
    %1096 = vmatpush1.msra.mxu0 %v96
    %1097 = vmatprep.subr.mxu0 0.0
    %1098 = vmatpush1.msra.mxu0 %v97
    %1099 = vmatprep.subr.mxu0 0.0
    %1100 = vmatpush1.msra.mxu0 %v98
    %1101 = vmatprep.subr.mxu0 0.0
    %1102 = vmatpush1.msra.mxu0 0.0
    %1103 = vmatprep.subr.mxu0 0.0
    %1104 = vmatpush1.msra.mxu0 0.0
    %1105 = vmatprep.subr.mxu0 0.0
    %1106 = vmatpush1.msra.mxu0 0.0
    %1107 = vmatprep.subr.mxu0 0.0
    %1108 = vmatpush1.msra.mxu0 0.0
    %1109 = vmatprep.subr.mxu0 0.0
    %1110 = vmatpush1.msra.mxu0 0.0
    %1111 = vmatprep.subr.mxu0 0.0
    %1112 = vmatpush1.msra.mxu0 0.0
    %1113 = vmatprep.subr.mxu0 0.0
    %1114 = vmatpush1.msra.mxu0 0.0
    %1115 = vmatprep.subr.mxu0 0.0
    %1116 = vmatpush1.msra.mxu0 0.0
    %1117 = vmatprep.subr.mxu0 0.0
    %1118 = vmatpush1.msra.mxu0 0.0
    %1119 = vmatprep.subr.mxu0 0.0
    %1120 = vmatpush1.msra.mxu0 0.0
    %1121 = vmatprep.subr.mxu0 0.0
    %1122 = vmatpush1.msra.mxu0 0.0
    %1123 = vmatprep.subr.mxu0 0.0
    %1124 = vmatpush1.msra.mxu0 0.0
    %1125 = vmatprep.subr.mxu0 0.0
    %1126 = vmatpush1.msra.mxu0 0.0
    %1127 = vmatprep.subr.mxu0 0.0
    %1128 = vmatpush1.msra.mxu0 0.0
    %1129 = vmatprep.subr.mxu0 0.0
    %1130 = vmatpush1.msra.mxu0 0.0
    %1131 = vmatprep.subr.mxu0 0.0
    %1132 = vmatpush1.msra.mxu0 0.0
    %1133 = vmatprep.subr.mxu0 0.0
    %1134 = vmatpush1.msra.mxu0 0.0
    %1135 = vmatprep.subr.mxu0 0.0
    %1136 = vmatpush1.msra.mxu0 0.0
    %1137 = vmatprep.subr.mxu0 0.0
    %1138 = vmatpush1.msra.mxu0 0.0
    %1139 = vmatprep.subr.mxu0 0.0
    %1140 = vmatpush1.msra.mxu0 0.0
    %1141 = vmatprep.subr.mxu0 0.0
    %1142 = vmatpush1.msra.mxu0 0.0
    %1143 = vmatprep.subr.mxu0 0.0
    %1144 = vmatpush1.msra.mxu0 0.0
    %1145 = vmatprep.subr.mxu0 0.0
    %1146 = vmatpush1.msra.mxu0 0.0
    %1147 = vmatprep.subr.mxu0 0.0
    %1148 = vmatpush1.msra.mxu0 0.0
    %1149 = vmatprep.subr.mxu0 0.0
    %1150 = vmatpush1.msra.mxu0 0.0
    %1151 = vmatprep.subr.mxu0 0.0
    %1152 = vmatpush1.msra.mxu0 0.0
    %1153 = vmatprep.subr.mxu0 0.0
    %1154 = vmatpush1.msra.mxu0 0.0
    %1155 = vmatprep.subr.mxu0 0.0
    %1156 = vmatpush1.msra.mxu0 0.0
    %1157 = vmatprep.mubr.f32.mxu0 0.0
    %1158 = vmatmul.mubr.f32.gmra.mrb[0].mxu0 %v1091
    %v1159 = vpop.f32.mrb[0].mxu0
    %v1160 = vadd.f32 %v287, %v1159
    %v1161 = vpop.f32.mrb[0].mxu0
    %1162 = vdwg.mxu0
    %1164 = vrot.lane.b32.xlu0 %v1088, 32
    %v1165 = vpop.permute.xlu0 %1164
    %v1166 = vsel %vm187, %v1165, 0
    %1168 = vmatprep.subr.mxu0 0.0
    %1169 = vmatpush1.msra.mxu0 %v91
    %1170 = vmatprep.subr.mxu0 0.0
    %1171 = vmatpush1.msra.mxu0 %v92
    %1172 = vmatprep.subr.mxu0 0.0
    %1173 = vmatpush1.msra.mxu0 %v93
    %1174 = vmatprep.subr.mxu0 0.0
    %1175 = vmatpush1.msra.mxu0 %v94
    %1176 = vmatprep.subr.mxu0 0.0
    %1177 = vmatpush1.msra.mxu0 0.0
    %1178 = vmatprep.subr.mxu0 0.0
    %1179 = vmatpush1.msra.mxu0 0.0
    %1180 = vmatprep.subr.mxu0 0.0
    %1181 = vmatpush1.msra.mxu0 0.0
    %1182 = vmatprep.subr.mxu0 0.0
    %1183 = vmatpush1.msra.mxu0 0.0
    %1184 = vmatprep.subr.mxu0 0.0
    %1185 = vmatpush1.msra.mxu0 0.0
    %1186 = vmatprep.subr.mxu0 0.0
    %1187 = vmatpush1.msra.mxu0 0.0
    %1188 = vmatprep.subr.mxu0 0.0
    %1189 = vmatpush1.msra.mxu0 0.0
    %1190 = vmatprep.subr.mxu0 0.0
    %1191 = vmatpush1.msra.mxu0 0.0
    %1192 = vmatprep.subr.mxu0 0.0
    %1193 = vmatpush1.msra.mxu0 0.0
    %1194 = vmatprep.subr.mxu0 0.0
    %1195 = vmatpush1.msra.mxu0 0.0
    %1196 = vmatprep.subr.mxu0 0.0
    %1197 = vmatpush1.msra.mxu0 0.0
    %1198 = vmatprep.subr.mxu0 0.0
    %1199 = vmatpush1.msra.mxu0 0.0
    %1200 = vmatprep.subr.mxu0 0.0
    %1201 = vmatpush1.msra.mxu0 0.0
    %1202 = vmatprep.subr.mxu0 0.0
    %1203 = vmatpush1.msra.mxu0 0.0
    %1204 = vmatprep.subr.mxu0 0.0
    %1205 = vmatpush1.msra.mxu0 0.0
    %1206 = vmatprep.subr.mxu0 0.0
    %1207 = vmatpush1.msra.mxu0 0.0
    %1208 = vmatprep.subr.mxu0 0.0
    %1209 = vmatpush1.msra.mxu0 0.0
    %1210 = vmatprep.subr.mxu0 0.0
    %1211 = vmatpush1.msra.mxu0 0.0
    %1212 = vmatprep.subr.mxu0 0.0
    %1213 = vmatpush1.msra.mxu0 0.0
    %1214 = vmatprep.subr.mxu0 0.0
    %1215 = vmatpush1.msra.mxu0 0.0
    %1216 = vmatprep.subr.mxu0 0.0
    %1217 = vmatpush1.msra.mxu0 0.0
    %1218 = vmatprep.subr.mxu0 0.0
    %1219 = vmatpush1.msra.mxu0 0.0
    %1220 = vmatprep.subr.mxu0 0.0
    %1221 = vmatpush1.msra.mxu0 0.0
    %1222 = vmatprep.subr.mxu0 0.0
    %1223 = vmatpush1.msra.mxu0 0.0
    %1224 = vmatprep.subr.mxu0 0.0
    %1225 = vmatpush1.msra.mxu0 0.0
    %1226 = vmatprep.subr.mxu0 0.0
    %1227 = vmatpush1.msra.mxu0 0.0
    %1228 = vmatprep.subr.mxu0 0.0
    %1229 = vmatpush1.msra.mxu0 0.0
    %1230 = vmatprep.subr.mxu0 0.0
    %1231 = vmatpush1.msra.mxu0 0.0
    %1232 = vmatprep.mubr.f32.mxu0 0.0
    %1233 = vmatmul.mubr.f32.gmra.mrb[0].mxu0 %v1166
    %v1234 = vpop.f32.mrb[0].mxu0
    %v1235 = vadd.f32 0.0, %v1234
    %v1236 = vpop.f32.mrb[0].mxu0
    %1237 = vdwg.mxu0
    %v1238 = vadd.f32 %v1160, %v1235
    %v1239 = vmul.f32 %v1238, %v186
    %v1240 = vtanh.pop %v1239
    %v1241 = vmul.f32 %v1240, 0.5
    %v1242 = vadd.f32 %v1241, 0.5
    %v1243 = vmul.f32 %v1242, %v984
    %1245 = vrot.lane.b32.xlu0 %v1240, 64
    %v1246 = vpop.permute.xlu0 %1245
    %v1248 = vmul.f32 %v1242, %v1246
    %1250 = vrot.lane.b32.xlu0 %v1248, 32
    %v1251 = vpop.permute.xlu0 %1250
    %v1253 = vadd.f32 %v1243, %v1251
    %v1254 = vtanh.pop %v1253
    %1256 = vrot.lane.b32.xlu0 %v1254, 64
    %v1257 = vpop.permute.xlu0 %1256
    %v1259 = vmul.f32 %v1242, %v1257
    %vm1260 = vcmask 1048320
    %1261 = vst.msk [vmem:[#allocation2] sm:$0xff] %vm1260, %v1259
    %1262 = vmatprep.subr.mxu0 0.0
    %1263 = vmatpush1.msra.mxu0 %v86
    %1264 = vmatprep.subr.mxu0 0.0
    %1265 = vmatpush1.msra.mxu0 %v87
    %1266 = vmatprep.subr.mxu0 0.0
    %1267 = vmatpush1.msra.mxu0 %v88
    %1268 = vmatprep.subr.mxu0 0.0
    %1269 = vmatpush1.msra.mxu0 %v89
    %1270 = vmatprep.subr.mxu0 0.0
    %1271 = vmatpush1.msra.mxu0 0.0
    %1272 = vmatprep.subr.mxu0 0.0
    %1273 = vmatpush1.msra.mxu0 0.0
    %1274 = vmatprep.subr.mxu0 0.0
    %1275 = vmatpush1.msra.mxu0 0.0
    %1276 = vmatprep.subr.mxu0 0.0
    %1277 = vmatpush1.msra.mxu0 0.0
    %1278 = vmatprep.subr.mxu0 0.0
    %1279 = vmatpush1.msra.mxu0 0.0
    %1280 = vmatprep.subr.mxu0 0.0
    %1281 = vmatpush1.msra.mxu0 0.0
    %1282 = vmatprep.subr.mxu0 0.0
    %1283 = vmatpush1.msra.mxu0 0.0
    %1284 = vmatprep.subr.mxu0 0.0
    %1285 = vmatpush1.msra.mxu0 0.0
    %1286 = vmatprep.subr.mxu0 0.0
    %1287 = vmatpush1.msra.mxu0 0.0
    %1288 = vmatprep.subr.mxu0 0.0
    %1289 = vmatpush1.msra.mxu0 0.0
    %1290 = vmatprep.subr.mxu0 0.0
    %1291 = vmatpush1.msra.mxu0 0.0
    %1292 = vmatprep.subr.mxu0 0.0
    %1293 = vmatpush1.msra.mxu0 0.0
    %1294 = vmatprep.subr.mxu0 0.0
    %1295 = vmatpush1.msra.mxu0 0.0
    %1296 = vmatprep.subr.mxu0 0.0
    %1297 = vmatpush1.msra.mxu0 0.0
    %1298 = vmatprep.subr.mxu0 0.0
    %1299 = vmatpush1.msra.mxu0 0.0
    %1300 = vmatprep.subr.mxu0 0.0
    %1301 = vmatpush1.msra.mxu0 0.0
    %1302 = vmatprep.subr.mxu0 0.0
    %1303 = vmatpush1.msra.mxu0 0.0
    %1304 = vmatprep.subr.mxu0 0.0
    %1305 = vmatpush1.msra.mxu0 0.0
    %1306 = vmatprep.subr.mxu0 0.0
    %1307 = vmatpush1.msra.mxu0 0.0
    %1308 = vmatprep.subr.mxu0 0.0
    %1309 = vmatpush1.msra.mxu0 0.0
    %1310 = vmatprep.subr.mxu0 0.0
    %1311 = vmatpush1.msra.mxu0 0.0
    %1312 = vmatprep.subr.mxu0 0.0
    %1313 = vmatpush1.msra.mxu0 0.0
    %1314 = vmatprep.subr.mxu0 0.0
    %1315 = vmatpush1.msra.mxu0 0.0
    %1316 = vmatprep.subr.mxu0 0.0
    %1317 = vmatpush1.msra.mxu0 0.0
    %1318 = vmatprep.subr.mxu0 0.0
    %1319 = vmatpush1.msra.mxu0 0.0
    %1320 = vmatprep.subr.mxu0 0.0
    %1321 = vmatpush1.msra.mxu0 0.0
    %1322 = vmatprep.subr.mxu0 0.0
    %1323 = vmatpush1.msra.mxu0 0.0
    %1324 = vmatprep.subr.mxu0 0.0
    %1325 = vmatpush1.msra.mxu0 0.0
    %1326 = vmatprep.mubr.f32.mxu0 0.0
    %1327 = vmatmul.mubr.f32.gmra.mrb[0].mxu0 %v1166
    %v1328 = vpop.f32.mrb[0].mxu0
    %v1329 = vadd.f32 0.0, %v1328
    %v1330 = vpop.f32.mrb[0].mxu0
    %1331 = vdwg.mxu0
    %v1332 = vadd.f32 %v178, %v1329
    %v1333 = vmul.f32 %v1332, %v186
    %v1334 = vtanh.pop %v1333
    %v1335 = vmul.f32 %v1334, 0.5
    %v1336 = vadd.f32 %v1335, 0.5
    %v1337 = vmul.f32 %v1336, %v1082
    %1339 = vrot.lane.b32.xlu0 %v1334, 64
    %v1340 = vpop.permute.xlu0 %1339
    %v1342 = vmul.f32 %v1336, %v1340
    %1344 = vrot.lane.b32.xlu0 %v1342, 32
    %v1345 = vpop.permute.xlu0 %1344
    %v1347 = vadd.f32 %v1337, %v1345
    %v1348 = vtanh.pop %v1347
    %1350 = vrot.lane.b32.xlu0 %v1348, 64
    %v1351 = vpop.permute.xlu0 %1350
    %v1353 = vmul.f32 %v1336, %v1351
    %1355 = vrot.lane.b32.xlu0 %v1259, 32
    %v1356 = vpop.permute.xlu0 %1355
    %v1357 = vsel %vm187, %v1356, 0
    %1359 = vmatprep.subr.mxu0 0.0
    %1360 = vmatpush1.msra.mxu0 %v95
    %1361 = vmatprep.subr.mxu0 0.0
    %1362 = vmatpush1.msra.mxu0 %v96
    %1363 = vmatprep.subr.mxu0 0.0
    %1364 = vmatpush1.msra.mxu0 %v97
    %1365 = vmatprep.subr.mxu0 0.0
    %1366 = vmatpush1.msra.mxu0 %v98
    %1367 = vmatprep.subr.mxu0 0.0
    %1368 = vmatpush1.msra.mxu0 0.0
    %1369 = vmatprep.subr.mxu0 0.0
    %1370 = vmatpush1.msra.mxu0 0.0
    %1371 = vmatprep.subr.mxu0 0.0
    %1372 = vmatpush1.msra.mxu0 0.0
    %1373 = vmatprep.subr.mxu0 0.0
    %1374 = vmatpush1.msra.mxu0 0.0
    %1375 = vmatprep.subr.mxu0 0.0
    %1376 = vmatpush1.msra.mxu0 0.0
    %1377 = vmatprep.subr.mxu0 0.0
    %1378 = vmatpush1.msra.mxu0 0.0
    %1379 = vmatprep.subr.mxu0 0.0
    %1380 = vmatpush1.msra.mxu0 0.0
    %1381 = vmatprep.subr.mxu0 0.0
    %1382 = vmatpush1.msra.mxu0 0.0
    %1383 = vmatprep.subr.mxu0 0.0
    %1384 = vmatpush1.msra.mxu0 0.0
    %1385 = vmatprep.subr.mxu0 0.0
    %1386 = vmatpush1.msra.mxu0 0.0
    %1387 = vmatprep.subr.mxu0 0.0
    %1388 = vmatpush1.msra.mxu0 0.0
    %1389 = vmatprep.subr.mxu0 0.0
    %1390 = vmatpush1.msra.mxu0 0.0
    %1391 = vmatprep.subr.mxu0 0.0
    %1392 = vmatpush1.msra.mxu0 0.0
    %1393 = vmatprep.subr.mxu0 0.0
    %1394 = vmatpush1.msra.mxu0 0.0
    %1395 = vmatprep.subr.mxu0 0.0
    %1396 = vmatpush1.msra.mxu0 0.0
    %1397 = vmatprep.subr.mxu0 0.0
    %1398 = vmatpush1.msra.mxu0 0.0
    %1399 = vmatprep.subr.mxu0 0.0
    %1400 = vmatpush1.msra.mxu0 0.0
    %1401 = vmatprep.subr.mxu0 0.0
    %1402 = vmatpush1.msra.mxu0 0.0
    %1403 = vmatprep.subr.mxu0 0.0
    %1404 = vmatpush1.msra.mxu0 0.0
    %1405 = vmatprep.subr.mxu0 0.0
    %1406 = vmatpush1.msra.mxu0 0.0
    %1407 = vmatprep.subr.mxu0 0.0
    %1408 = vmatpush1.msra.mxu0 0.0
    %1409 = vmatprep.subr.mxu0 0.0
    %1410 = vmatpush1.msra.mxu0 0.0
    %1411 = vmatprep.subr.mxu0 0.0
    %1412 = vmatpush1.msra.mxu0 0.0
    %1413 = vmatprep.subr.mxu0 0.0
    %1414 = vmatpush1.msra.mxu0 0.0
    %1415 = vmatprep.subr.mxu0 0.0
    %1416 = vmatpush1.msra.mxu0 0.0
    %1417 = vmatprep.subr.mxu0 0.0
    %1418 = vmatpush1.msra.mxu0 0.0
    %1419 = vmatprep.subr.mxu0 0.0
    %1420 = vmatpush1.msra.mxu0 0.0
    %1421 = vmatprep.subr.mxu0 0.0
    %1422 = vmatpush1.msra.mxu0 0.0
    %1423 = vmatprep.mubr.f32.mxu0 0.0
    %1424 = vmatmul.mubr.f32.gmra.mrb[0].mxu0 %v1357
    %v1425 = vpop.f32.mrb[0].mxu0
    %v1426 = vadd.f32 %v287, %v1425
    %v1427 = vpop.f32.mrb[0].mxu0
    %1428 = vdwg.mxu0
    %1430 = vrot.lane.b32.xlu0 %v1353, 32
    %v1431 = vpop.permute.xlu0 %1430
    %v1432 = vsel %vm187, %v1431, 0
    %1434 = vmatprep.subr.mxu0 0.0
    %1435 = vmatpush1.msra.mxu0 %v91
    %1436 = vmatprep.subr.mxu0 0.0
    %1437 = vmatpush1.msra.mxu0 %v92
    %1438 = vmatprep.subr.mxu0 0.0
    %1439 = vmatpush1.msra.mxu0 %v93
    %1440 = vmatprep.subr.mxu0 0.0
    %1441 = vmatpush1.msra.mxu0 %v94
    %1442 = vmatprep.subr.mxu0 0.0
    %1443 = vmatpush1.msra.mxu0 0.0
    %1444 = vmatprep.subr.mxu0 0.0
    %1445 = vmatpush1.msra.mxu0 0.0
    %1446 = vmatprep.subr.mxu0 0.0
    %1447 = vmatpush1.msra.mxu0 0.0
    %1448 = vmatprep.subr.mxu0 0.0
    %1449 = vmatpush1.msra.mxu0 0.0
    %1450 = vmatprep.subr.mxu0 0.0
    %1451 = vmatpush1.msra.mxu0 0.0
    %1452 = vmatprep.subr.mxu0 0.0
    %1453 = vmatpush1.msra.mxu0 0.0
    %1454 = vmatprep.subr.mxu0 0.0
    %1455 = vmatpush1.msra.mxu0 0.0
    %1456 = vmatprep.subr.mxu0 0.0
    %1457 = vmatpush1.msra.mxu0 0.0
    %1458 = vmatprep.subr.mxu0 0.0
    %1459 = vmatpush1.msra.mxu0 0.0
    %1460 = vmatprep.subr.mxu0 0.0
    %1461 = vmatpush1.msra.mxu0 0.0
    %1462 = vmatprep.subr.mxu0 0.0
    %1463 = vmatpush1.msra.mxu0 0.0
    %1464 = vmatprep.subr.mxu0 0.0
    %1465 = vmatpush1.msra.mxu0 0.0
    %1466 = vmatprep.subr.mxu0 0.0
    %1467 = vmatpush1.msra.mxu0 0.0
    %1468 = vmatprep.subr.mxu0 0.0
    %1469 = vmatpush1.msra.mxu0 0.0
    %1470 = vmatprep.subr.mxu0 0.0
    %1471 = vmatpush1.msra.mxu0 0.0
    %1472 = vmatprep.subr.mxu0 0.0
    %1473 = vmatpush1.msra.mxu0 0.0
    %1474 = vmatprep.subr.mxu0 0.0
    %1475 = vmatpush1.msra.mxu0 0.0
    %1476 = vmatprep.subr.mxu0 0.0
    %1477 = vmatpush1.msra.mxu0 0.0
    %1478 = vmatprep.subr.mxu0 0.0
    %1479 = vmatpush1.msra.mxu0 0.0
    %1480 = vmatprep.subr.mxu0 0.0
    %1481 = vmatpush1.msra.mxu0 0.0
    %1482 = vmatprep.subr.mxu0 0.0
    %1483 = vmatpush1.msra.mxu0 0.0
    %1484 = vmatprep.subr.mxu0 0.0
    %1485 = vmatpush1.msra.mxu0 0.0
    %1486 = vmatprep.subr.mxu0 0.0
    %1487 = vmatpush1.msra.mxu0 0.0
    %1488 = vmatprep.subr.mxu0 0.0
    %1489 = vmatpush1.msra.mxu0 0.0
    %1490 = vmatprep.subr.mxu0 0.0
    %1491 = vmatpush1.msra.mxu0 0.0
    %1492 = vmatprep.subr.mxu0 0.0
    %1493 = vmatpush1.msra.mxu0 0.0
    %1494 = vmatprep.subr.mxu0 0.0
    %1495 = vmatpush1.msra.mxu0 0.0
    %1496 = vmatprep.subr.mxu0 0.0
    %1497 = vmatpush1.msra.mxu0 0.0
    %1498 = vmatprep.mubr.f32.mxu0 0.0
    %1499 = vmatmul.mubr.f32.gmra.mrb[0].mxu0 %v1432
    %v1500 = vpop.f32.mrb[0].mxu0
    %v1501 = vadd.f32 0.0, %v1500
    %v1502 = vpop.f32.mrb[0].mxu0
    %1503 = vdwg.mxu0
    %v1504 = vadd.f32 %v1426, %v1501
    %v1505 = vmul.f32 %v1504, %v186
    %v1506 = vtanh.pop %v1505
    %v1507 = vmul.f32 %v1506, 0.5
    %v1508 = vadd.f32 %v1507, 0.5
    %v1509 = vmul.f32 %v1508, %v1253
    %1511 = vrot.lane.b32.xlu0 %v1506, 64
    %v1512 = vpop.permute.xlu0 %1511
    %v1514 = vmul.f32 %v1508, %v1512
    %1516 = vrot.lane.b32.xlu0 %v1514, 32
    %v1517 = vpop.permute.xlu0 %1516
    %v1519 = vadd.f32 %v1509, %v1517
    %v1520 = vtanh.pop %v1519
    %1522 = vrot.lane.b32.xlu0 %v1520, 64
    %v1523 = vpop.permute.xlu0 %1522
    %v1525 = vmul.f32 %v1508, %v1523
    %1527 = vrot.lane.b32.xlu0 %v1525, 32
    %v1528 = vpop.permute.xlu0 %1527
    %1530 = vst.msk [vmem:[#allocation2 + $0x8] sm:$0xff] %vm187, %v1528
    %1531 = vmatprep.subr.mxu0 0.0
    %1532 = vmatpush1.msra.mxu0 %v86
    %1533 = vmatprep.subr.mxu0 0.0
    %1534 = vmatpush1.msra.mxu0 %v87
    %1535 = vmatprep.subr.mxu0 0.0
    %1536 = vmatpush1.msra.mxu0 %v88
    %1537 = vmatprep.subr.mxu0 0.0
    %1538 = vmatpush1.msra.mxu0 %v89
    %1539 = vmatprep.subr.mxu0 0.0
    %1540 = vmatpush1.msra.mxu0 0.0
    %1541 = vmatprep.subr.mxu0 0.0
    %1542 = vmatpush1.msra.mxu0 0.0
    %1543 = vmatprep.subr.mxu0 0.0
    %1544 = vmatpush1.msra.mxu0 0.0
    %1545 = vmatprep.subr.mxu0 0.0
    %1546 = vmatpush1.msra.mxu0 0.0
    %1547 = vmatprep.subr.mxu0 0.0
    %1548 = vmatpush1.msra.mxu0 0.0
    %1549 = vmatprep.subr.mxu0 0.0
    %1550 = vmatpush1.msra.mxu0 0.0
    %1551 = vmatprep.subr.mxu0 0.0
    %1552 = vmatpush1.msra.mxu0 0.0
    %1553 = vmatprep.subr.mxu0 0.0
    %1554 = vmatpush1.msra.mxu0 0.0
    %1555 = vmatprep.subr.mxu0 0.0
    %1556 = vmatpush1.msra.mxu0 0.0
    %1557 = vmatprep.subr.mxu0 0.0
    %1558 = vmatpush1.msra.mxu0 0.0
    %1559 = vmatprep.subr.mxu0 0.0
    %1560 = vmatpush1.msra.mxu0 0.0
    %1561 = vmatprep.subr.mxu0 0.0
    %1562 = vmatpush1.msra.mxu0 0.0
    %1563 = vmatprep.subr.mxu0 0.0
    %1564 = vmatpush1.msra.mxu0 0.0
    %1565 = vmatprep.subr.mxu0 0.0
    %1566 = vmatpush1.msra.mxu0 0.0
    %1567 = vmatprep.subr.mxu0 0.0
    %1568 = vmatpush1.msra.mxu0 0.0
    %1569 = vmatprep.subr.mxu0 0.0
    %1570 = vmatpush1.msra.mxu0 0.0
    %1571 = vmatprep.subr.mxu0 0.0
    %1572 = vmatpush1.msra.mxu0 0.0
    %1573 = vmatprep.subr.mxu0 0.0
    %1574 = vmatpush1.msra.mxu0 0.0
    %1575 = vmatprep.subr.mxu0 0.0
    %1576 = vmatpush1.msra.mxu0 0.0
    %1577 = vmatprep.subr.mxu0 0.0
    %1578 = vmatpush1.msra.mxu0 0.0
    %1579 = vmatprep.subr.mxu0 0.0
    %1580 = vmatpush1.msra.mxu0 0.0
    %1581 = vmatprep.subr.mxu0 0.0
    %1582 = vmatpush1.msra.mxu0 0.0
    %1583 = vmatprep.subr.mxu0 0.0
    %1584 = vmatpush1.msra.mxu0 0.0
    %1585 = vmatprep.subr.mxu0 0.0
    %1586 = vmatpush1.msra.mxu0 0.0
    %1587 = vmatprep.subr.mxu0 0.0
    %1588 = vmatpush1.msra.mxu0 0.0
    %1589 = vmatprep.subr.mxu0 0.0
    %1590 = vmatpush1.msra.mxu0 0.0
    %1591 = vmatprep.subr.mxu0 0.0
    %1592 = vmatpush1.msra.mxu0 0.0
    %1593 = vmatprep.subr.mxu0 0.0
    %1594 = vmatpush1.msra.mxu0 0.0
    %1595 = vmatprep.mubr.f32.mxu0 0.0
    %1596 = vmatmul.mubr.f32.gmra.mrb[0].mxu0 %v1432
    %v1597 = vpop.f32.mrb[0].mxu0
    %v1598 = vadd.f32 0.0, %v1597
    %v1599 = vpop.f32.mrb[0].mxu0
    %1600 = vdwg.mxu0
    %v1601 = vadd.f32 %v178, %v1598
    %v1602 = vmul.f32 %v1601, %v186
    %v1603 = vtanh.pop %v1602
    %v1604 = vmul.f32 %v1603, 0.5
    %v1605 = vadd.f32 %v1604, 0.5
    %v1606 = vmul.f32 %v1605, %v1347
    %1608 = vrot.lane.b32.xlu0 %v1603, 64
    %v1609 = vpop.permute.xlu0 %1608
    %v1611 = vmul.f32 %v1605, %v1609
    %1613 = vrot.lane.b32.xlu0 %v1611, 32
    %v1614 = vpop.permute.xlu0 %1613
    %v1616 = vadd.f32 %v1606, %v1614
    %v1617 = vtanh.pop %v1616
    %1619 = vrot.lane.b32.xlu0 %v1617, 64
    %v1620 = vpop.permute.xlu0 %1619
    %v1622 = vmul.f32 %v1605, %v1620
    %v1623 = vsel %vm187, %v1528, 0
    %1625 = vmatprep.subr.mxu0 0.0
    %1626 = vmatpush1.msra.mxu0 %v95
    %1627 = vmatprep.subr.mxu0 0.0
    %1628 = vmatpush1.msra.mxu0 %v96
    %1629 = vmatprep.subr.mxu0 0.0
    %1630 = vmatpush1.msra.mxu0 %v97
    %1631 = vmatprep.subr.mxu0 0.0
    %1632 = vmatpush1.msra.mxu0 %v98
    %1633 = vmatprep.subr.mxu0 0.0
    %1634 = vmatpush1.msra.mxu0 0.0
    %1635 = vmatprep.subr.mxu0 0.0
    %1636 = vmatpush1.msra.mxu0 0.0
    %1637 = vmatprep.subr.mxu0 0.0
    %1638 = vmatpush1.msra.mxu0 0.0
    %1639 = vmatprep.subr.mxu0 0.0
    %1640 = vmatpush1.msra.mxu0 0.0
    %1641 = vmatprep.subr.mxu0 0.0
    %1642 = vmatpush1.msra.mxu0 0.0
    %1643 = vmatprep.subr.mxu0 0.0
    %1644 = vmatpush1.msra.mxu0 0.0
    %1645 = vmatprep.subr.mxu0 0.0
    %1646 = vmatpush1.msra.mxu0 0.0
    %1647 = vmatprep.subr.mxu0 0.0
    %1648 = vmatpush1.msra.mxu0 0.0
    %1649 = vmatprep.subr.mxu0 0.0
    %1650 = vmatpush1.msra.mxu0 0.0
    %1651 = vmatprep.subr.mxu0 0.0
    %1652 = vmatpush1.msra.mxu0 0.0
    %1653 = vmatprep.subr.mxu0 0.0
    %1654 = vmatpush1.msra.mxu0 0.0
    %1655 = vmatprep.subr.mxu0 0.0
    %1656 = vmatpush1.msra.mxu0 0.0
    %1657 = vmatprep.subr.mxu0 0.0
    %1658 = vmatpush1.msra.mxu0 0.0
    %1659 = vmatprep.subr.mxu0 0.0
    %1660 = vmatpush1.msra.mxu0 0.0
    %1661 = vmatprep.subr.mxu0 0.0
    %1662 = vmatpush1.msra.mxu0 0.0
    %1663 = vmatprep.subr.mxu0 0.0
    %1664 = vmatpush1.msra.mxu0 0.0
    %1665 = vmatprep.subr.mxu0 0.0
    %1666 = vmatpush1.msra.mxu0 0.0
    %1667 = vmatprep.subr.mxu0 0.0
    %1668 = vmatpush1.msra.mxu0 0.0
    %1669 = vmatprep.subr.mxu0 0.0
    %1670 = vmatpush1.msra.mxu0 0.0
    %1671 = vmatprep.subr.mxu0 0.0
    %1672 = vmatpush1.msra.mxu0 0.0
    %1673 = vmatprep.subr.mxu0 0.0
    %1674 = vmatpush1.msra.mxu0 0.0
    %1675 = vmatprep.subr.mxu0 0.0
    %1676 = vmatpush1.msra.mxu0 0.0
    %1677 = vmatprep.subr.mxu0 0.0
    %1678 = vmatpush1.msra.mxu0 0.0
    %1679 = vmatprep.subr.mxu0 0.0
    %1680 = vmatpush1.msra.mxu0 0.0
    %1681 = vmatprep.subr.mxu0 0.0
    %1682 = vmatpush1.msra.mxu0 0.0
    %1683 = vmatprep.subr.mxu0 0.0
    %1684 = vmatpush1.msra.mxu0 0.0
    %1685 = vmatprep.subr.mxu0 0.0
    %1686 = vmatpush1.msra.mxu0 0.0
    %1687 = vmatprep.subr.mxu0 0.0
    %1688 = vmatpush1.msra.mxu0 0.0
    %1689 = vmatprep.mubr.f32.mxu0 0.0
    %1690 = vmatmul.mubr.f32.gmra.mrb[0].mxu0 %v1623
    %v1691 = vpop.f32.mrb[0].mxu0
    %v1692 = vadd.f32 %v287, %v1691
    %v1693 = vpop.f32.mrb[0].mxu0
    %1694 = vdwg.mxu0
    %1696 = vrot.lane.b32.xlu0 %v1622, 32
    %v1697 = vpop.permute.xlu0 %1696
    %v1698 = vsel %vm187, %v1697, 0
    %1700 = vmatprep.subr.mxu0 0.0
    %1701 = vmatpush1.msra.mxu0 %v91
    %1702 = vmatprep.subr.mxu0 0.0
    %1703 = vmatpush1.msra.mxu0 %v92
    %1704 = vmatprep.subr.mxu0 0.0
    %1705 = vmatpush1.msra.mxu0 %v93
    %1706 = vmatprep.subr.mxu0 0.0
    %1707 = vmatpush1.msra.mxu0 %v94
    %1708 = vmatprep.subr.mxu0 0.0
    %1709 = vmatpush1.msra.mxu0 0.0
    %1710 = vmatprep.subr.mxu0 0.0
    %1711 = vmatpush1.msra.mxu0 0.0
    %1712 = vmatprep.subr.mxu0 0.0
    %1713 = vmatpush1.msra.mxu0 0.0
    %1714 = vmatprep.subr.mxu0 0.0
    %1715 = vmatpush1.msra.mxu0 0.0
    %1716 = vmatprep.subr.mxu0 0.0
    %1717 = vmatpush1.msra.mxu0 0.0
    %1718 = vmatprep.subr.mxu0 0.0
    %1719 = vmatpush1.msra.mxu0 0.0
    %1720 = vmatprep.subr.mxu0 0.0
    %1721 = vmatpush1.msra.mxu0 0.0
    %1722 = vmatprep.subr.mxu0 0.0
    %1723 = vmatpush1.msra.mxu0 0.0
    %1724 = vmatprep.subr.mxu0 0.0
    %1725 = vmatpush1.msra.mxu0 0.0
    %1726 = vmatprep.subr.mxu0 0.0
    %1727 = vmatpush1.msra.mxu0 0.0
    %1728 = vmatprep.subr.mxu0 0.0
    %1729 = vmatpush1.msra.mxu0 0.0
    %1730 = vmatprep.subr.mxu0 0.0
    %1731 = vmatpush1.msra.mxu0 0.0
    %1732 = vmatprep.subr.mxu0 0.0
    %1733 = vmatpush1.msra.mxu0 0.0
    %1734 = vmatprep.subr.mxu0 0.0
    %1735 = vmatpush1.msra.mxu0 0.0
    %1736 = vmatprep.subr.mxu0 0.0
    %1737 = vmatpush1.msra.mxu0 0.0
    %1738 = vmatprep.subr.mxu0 0.0
    %1739 = vmatpush1.msra.mxu0 0.0
    %1740 = vmatprep.subr.mxu0 0.0
    %1741 = vmatpush1.msra.mxu0 0.0
    %1742 = vmatprep.subr.mxu0 0.0
    %1743 = vmatpush1.msra.mxu0 0.0
    %1744 = vmatprep.subr.mxu0 0.0
    %1745 = vmatpush1.msra.mxu0 0.0
    %1746 = vmatprep.subr.mxu0 0.0
    %1747 = vmatpush1.msra.mxu0 0.0
    %1748 = vmatprep.subr.mxu0 0.0
    %1749 = vmatpush1.msra.mxu0 0.0
    %1750 = vmatprep.subr.mxu0 0.0
    %1751 = vmatpush1.msra.mxu0 0.0
    %1752 = vmatprep.subr.mxu0 0.0
    %1753 = vmatpush1.msra.mxu0 0.0
    %1754 = vmatprep.subr.mxu0 0.0
    %1755 = vmatpush1.msra.mxu0 0.0
    %1756 = vmatprep.subr.mxu0 0.0
    %1757 = vmatpush1.msra.mxu0 0.0
    %1758 = vmatprep.subr.mxu0 0.0
    %1759 = vmatpush1.msra.mxu0 0.0
    %1760 = vmatprep.subr.mxu0 0.0
    %1761 = vmatpush1.msra.mxu0 0.0
    %1762 = vmatprep.subr.mxu0 0.0
    %1763 = vmatpush1.msra.mxu0 0.0
    %1764 = vmatprep.mubr.f32.mxu0 0.0
    %1765 = vmatmul.mubr.f32.gmra.mrb[0].mxu0 %v1698
    %v1766 = vpop.f32.mrb[0].mxu0
    %v1767 = vadd.f32 0.0, %v1766
    %v1768 = vpop.f32.mrb[0].mxu0
    %1769 = vdwg.mxu0
    %v1770 = vadd.f32 %v1692, %v1767
    %v1771 = vmul.f32 %v1770, %v186
    %v1772 = vtanh.pop %v1771
    %v1773 = vmul.f32 %v1772, 0.5
    %v1774 = vadd.f32 %v1773, 0.5
    %v1775 = vmul.f32 %v1774, %v1519
    %1777 = vrot.lane.b32.xlu0 %v1772, 64
    %v1778 = vpop.permute.xlu0 %1777
    %v1780 = vmul.f32 %v1774, %v1778
    %1782 = vrot.lane.b32.xlu0 %v1780, 32
    %v1783 = vpop.permute.xlu0 %1782
    %v1785 = vadd.f32 %v1775, %v1783
    %v1786 = vtanh.pop %v1785
    %1788 = vrot.lane.b32.xlu0 %v1786, 64
    %v1789 = vpop.permute.xlu0 %1788
    %v1791 = vmul.f32 %v1774, %v1789
    %1793 = vrot.lane.b32.xlu0 %v1791, 64
    %v1794 = vpop.permute.xlu0 %1793
    %1796 = vst.msk [vmem:[#allocation2 + $0x8] sm:$0xff] %vm726, %v1794
    %1797 = vmatprep.subr.mxu0 0.0
    %1798 = vmatpush1.msra.mxu0 %v86
    %1799 = vmatprep.subr.mxu0 0.0
    %1800 = vmatpush1.msra.mxu0 %v87
    %1801 = vmatprep.subr.mxu0 0.0
    %1802 = vmatpush1.msra.mxu0 %v88
    %1803 = vmatprep.subr.mxu0 0.0
    %1804 = vmatpush1.msra.mxu0 %v89
    %1805 = vmatprep.subr.mxu0 0.0
    %1806 = vmatpush1.msra.mxu0 0.0
    %1807 = vmatprep.subr.mxu0 0.0
    %1808 = vmatpush1.msra.mxu0 0.0
    %1809 = vmatprep.subr.mxu0 0.0
    %1810 = vmatpush1.msra.mxu0 0.0
    %1811 = vmatprep.subr.mxu0 0.0
    %1812 = vmatpush1.msra.mxu0 0.0
    %1813 = vmatprep.subr.mxu0 0.0
    %1814 = vmatpush1.msra.mxu0 0.0
    %1815 = vmatprep.subr.mxu0 0.0
    %1816 = vmatpush1.msra.mxu0 0.0
    %1817 = vmatprep.subr.mxu0 0.0
    %1818 = vmatpush1.msra.mxu0 0.0
    %1819 = vmatprep.subr.mxu0 0.0
    %1820 = vmatpush1.msra.mxu0 0.0
    %1821 = vmatprep.subr.mxu0 0.0
    %1822 = vmatpush1.msra.mxu0 0.0
    %1823 = vmatprep.subr.mxu0 0.0
    %1824 = vmatpush1.msra.mxu0 0.0
    %1825 = vmatprep.subr.mxu0 0.0
    %1826 = vmatpush1.msra.mxu0 0.0
    %1827 = vmatprep.subr.mxu0 0.0
    %1828 = vmatpush1.msra.mxu0 0.0
    %1829 = vmatprep.subr.mxu0 0.0
    %1830 = vmatpush1.msra.mxu0 0.0
    %1831 = vmatprep.subr.mxu0 0.0
    %1832 = vmatpush1.msra.mxu0 0.0
    %1833 = vmatprep.subr.mxu0 0.0
    %1834 = vmatpush1.msra.mxu0 0.0
    %1835 = vmatprep.subr.mxu0 0.0
    %1836 = vmatpush1.msra.mxu0 0.0
    %1837 = vmatprep.subr.mxu0 0.0
    %1838 = vmatpush1.msra.mxu0 0.0
    %1839 = vmatprep.subr.mxu0 0.0
    %1840 = vmatpush1.msra.mxu0 0.0
    %1841 = vmatprep.subr.mxu0 0.0
    %1842 = vmatpush1.msra.mxu0 0.0
    %1843 = vmatprep.subr.mxu0 0.0
    %1844 = vmatpush1.msra.mxu0 0.0
    %1845 = vmatprep.subr.mxu0 0.0
    %1846 = vmatpush1.msra.mxu0 0.0
    %1847 = vmatprep.subr.mxu0 0.0
    %1848 = vmatpush1.msra.mxu0 0.0
    %1849 = vmatprep.subr.mxu0 0.0
    %1850 = vmatpush1.msra.mxu0 0.0
    %1851 = vmatprep.subr.mxu0 0.0
    %1852 = vmatpush1.msra.mxu0 0.0
    %1853 = vmatprep.subr.mxu0 0.0
    %1854 = vmatpush1.msra.mxu0 0.0
    %1855 = vmatprep.subr.mxu0 0.0
    %1856 = vmatpush1.msra.mxu0 0.0
    %1857 = vmatprep.subr.mxu0 0.0
    %1858 = vmatpush1.msra.mxu0 0.0
    %1859 = vmatprep.subr.mxu0 0.0
    %1860 = vmatpush1.msra.mxu0 0.0
    %1861 = vmatprep.mubr.f32.mxu0 0.0
    %1862 = vmatmul.mubr.f32.gmra.mrb[0].mxu0 %v1698
    %v1863 = vpop.f32.mrb[0].mxu0
    %v1864 = vadd.f32 0.0, %v1863
    %v1865 = vpop.f32.mrb[0].mxu0
    %1866 = vdwg.mxu0
    %v1867 = vadd.f32 %v178, %v1864
    %v1868 = vmul.f32 %v1867, %v186
    %v1869 = vtanh.pop %v1868
    %v1870 = vmul.f32 %v1869, 0.5
    %v1871 = vadd.f32 %v1870, 0.5
    %v1872 = vmul.f32 %v1871, %v1616
    %1874 = vrot.lane.b32.xlu0 %v1869, 64
    %v1875 = vpop.permute.xlu0 %1874
    %v1877 = vmul.f32 %v1871, %v1875
    %1879 = vrot.lane.b32.xlu0 %v1877, 32
    %v1880 = vpop.permute.xlu0 %1879
    %v1882 = vadd.f32 %v1872, %v1880
    %v1883 = vtanh.pop %v1882
    %1885 = vrot.lane.b32.xlu0 %v1883, 64
    %v1886 = vpop.permute.xlu0 %1885
    %v1888 = vmul.f32 %v1871, %v1886
    %1889 = vrot.lane.b32.xlu0 %v1791, 32
    %v1890 = vpop.permute.xlu0 %1889
    %v1891 = vsel %vm187, %v1890, 0
    %1893 = vmatprep.subr.mxu0 0.0
    %1894 = vmatpush1.msra.mxu0 %v95
    %1895 = vmatprep.subr.mxu0 0.0
    %1896 = vmatpush1.msra.mxu0 %v96
    %1897 = vmatprep.subr.mxu0 0.0
    %1898 = vmatpush1.msra.mxu0 %v97
    %1899 = vmatprep.subr.mxu0 0.0
    %1900 = vmatpush1.msra.mxu0 %v98
    %1901 = vmatprep.subr.mxu0 0.0
    %1902 = vmatpush1.msra.mxu0 0.0
    %1903 = vmatprep.subr.mxu0 0.0
    %1904 = vmatpush1.msra.mxu0 0.0
    %1905 = vmatprep.subr.mxu0 0.0
    %1906 = vmatpush1.msra.mxu0 0.0
    %1907 = vmatprep.subr.mxu0 0.0
    %1908 = vmatpush1.msra.mxu0 0.0
    %1909 = vmatprep.subr.mxu0 0.0
    %1910 = vmatpush1.msra.mxu0 0.0
    %1911 = vmatprep.subr.mxu0 0.0
    %1912 = vmatpush1.msra.mxu0 0.0
    %1913 = vmatprep.subr.mxu0 0.0
    %1914 = vmatpush1.msra.mxu0 0.0
    %1915 = vmatprep.subr.mxu0 0.0
    %1916 = vmatpush1.msra.mxu0 0.0
    %1917 = vmatprep.subr.mxu0 0.0
    %1918 = vmatpush1.msra.mxu0 0.0
    %1919 = vmatprep.subr.mxu0 0.0
    %1920 = vmatpush1.msra.mxu0 0.0
    %1921 = vmatprep.subr.mxu0 0.0
    %1922 = vmatpush1.msra.mxu0 0.0
    %1923 = vmatprep.subr.mxu0 0.0
    %1924 = vmatpush1.msra.mxu0 0.0
    %1925 = vmatprep.subr.mxu0 0.0
    %1926 = vmatpush1.msra.mxu0 0.0
    %1927 = vmatprep.subr.mxu0 0.0
    %1928 = vmatpush1.msra.mxu0 0.0
    %1929 = vmatprep.subr.mxu0 0.0
    %1930 = vmatpush1.msra.mxu0 0.0
    %1931 = vmatprep.subr.mxu0 0.0
    %1932 = vmatpush1.msra.mxu0 0.0
    %1933 = vmatprep.subr.mxu0 0.0
    %1934 = vmatpush1.msra.mxu0 0.0
    %1935 = vmatprep.subr.mxu0 0.0
    %1936 = vmatpush1.msra.mxu0 0.0
    %1937 = vmatprep.subr.mxu0 0.0
    %1938 = vmatpush1.msra.mxu0 0.0
    %1939 = vmatprep.subr.mxu0 0.0
    %1940 = vmatpush1.msra.mxu0 0.0
    %1941 = vmatprep.subr.mxu0 0.0
    %1942 = vmatpush1.msra.mxu0 0.0
    %1943 = vmatprep.subr.mxu0 0.0
    %1944 = vmatpush1.msra.mxu0 0.0
    %1945 = vmatprep.subr.mxu0 0.0
    %1946 = vmatpush1.msra.mxu0 0.0
    %1947 = vmatprep.subr.mxu0 0.0
    %1948 = vmatpush1.msra.mxu0 0.0
    %1949 = vmatprep.subr.mxu0 0.0
    %1950 = vmatpush1.msra.mxu0 0.0
    %1951 = vmatprep.subr.mxu0 0.0
    %1952 = vmatpush1.msra.mxu0 0.0
    %1953 = vmatprep.subr.mxu0 0.0
    %1954 = vmatpush1.msra.mxu0 0.0
    %1955 = vmatprep.subr.mxu0 0.0
    %1956 = vmatpush1.msra.mxu0 0.0
    %1957 = vmatprep.mubr.f32.mxu0 0.0
    %1958 = vmatmul.mubr.f32.gmra.mrb[0].mxu0 %v1891
    %v1959 = vpop.f32.mrb[0].mxu0
    %v1960 = vadd.f32 %v287, %v1959
    %v1961 = vpop.f32.mrb[0].mxu0
    %1962 = vdwg.mxu0
    %1964 = vrot.lane.b32.xlu0 %v1888, 32
    %v1965 = vpop.permute.xlu0 %1964
    %v1966 = vsel %vm187, %v1965, 0
    %1968 = vmatprep.subr.mxu0 0.0
    %1969 = vmatpush1.msra.mxu0 %v91
    %1970 = vmatprep.subr.mxu0 0.0
    %1971 = vmatpush1.msra.mxu0 %v92
    %1972 = vmatprep.subr.mxu0 0.0
    %1973 = vmatpush1.msra.mxu0 %v93
    %1974 = vmatprep.subr.mxu0 0.0
    %1975 = vmatpush1.msra.mxu0 %v94
    %1976 = vmatprep.subr.mxu0 0.0
    %1977 = vmatpush1.msra.mxu0 0.0
    %1978 = vmatprep.subr.mxu0 0.0
    %1979 = vmatpush1.msra.mxu0 0.0
    %1980 = vmatprep.subr.mxu0 0.0
    %1981 = vmatpush1.msra.mxu0 0.0
    %1982 = vmatprep.subr.mxu0 0.0
    %1983 = vmatpush1.msra.mxu0 0.0
    %1984 = vmatprep.subr.mxu0 0.0
    %1985 = vmatpush1.msra.mxu0 0.0
    %1986 = vmatprep.subr.mxu0 0.0
    %1987 = vmatpush1.msra.mxu0 0.0
    %1988 = vmatprep.subr.mxu0 0.0
    %1989 = vmatpush1.msra.mxu0 0.0
    %1990 = vmatprep.subr.mxu0 0.0
    %1991 = vmatpush1.msra.mxu0 0.0
    %1992 = vmatprep.subr.mxu0 0.0
    %1993 = vmatpush1.msra.mxu0 0.0
    %1994 = vmatprep.subr.mxu0 0.0
    %1995 = vmatpush1.msra.mxu0 0.0
    %1996 = vmatprep.subr.mxu0 0.0
    %1997 = vmatpush1.msra.mxu0 0.0
    %1998 = vmatprep.subr.mxu0 0.0
    %1999 = vmatpush1.msra.mxu0 0.0
    %2000 = vmatprep.subr.mxu0 0.0
    %2001 = vmatpush1.msra.mxu0 0.0
    %2002 = vmatprep.subr.mxu0 0.0
    %2003 = vmatpush1.msra.mxu0 0.0
    %2004 = vmatprep.subr.mxu0 0.0
    %2005 = vmatpush1.msra.mxu0 0.0
    %2006 = vmatprep.subr.mxu0 0.0
    %2007 = vmatpush1.msra.mxu0 0.0
    %2008 = vmatprep.subr.mxu0 0.0
    %2009 = vmatpush1.msra.mxu0 0.0
    %2010 = vmatprep.subr.mxu0 0.0
    %2011 = vmatpush1.msra.mxu0 0.0
    %2012 = vmatprep.subr.mxu0 0.0
    %2013 = vmatpush1.msra.mxu0 0.0
    %2014 = vmatprep.subr.mxu0 0.0
    %2015 = vmatpush1.msra.mxu0 0.0
    %2016 = vmatprep.subr.mxu0 0.0
    %2017 = vmatpush1.msra.mxu0 0.0
    %2018 = vmatprep.subr.mxu0 0.0
    %2019 = vmatpush1.msra.mxu0 0.0
    %2020 = vmatprep.subr.mxu0 0.0
    %2021 = vmatpush1.msra.mxu0 0.0
    %2022 = vmatprep.subr.mxu0 0.0
    %2023 = vmatpush1.msra.mxu0 0.0
    %2024 = vmatprep.subr.mxu0 0.0
    %2025 = vmatpush1.msra.mxu0 0.0
    %2026 = vmatprep.subr.mxu0 0.0
    %2027 = vmatpush1.msra.mxu0 0.0
    %2028 = vmatprep.subr.mxu0 0.0
    %2029 = vmatpush1.msra.mxu0 0.0
    %2030 = vmatprep.subr.mxu0 0.0
    %2031 = vmatpush1.msra.mxu0 0.0
    %2032 = vmatprep.mubr.f32.mxu0 0.0
    %2033 = vmatmul.mubr.f32.gmra.mrb[0].mxu0 %v1966
    %v2034 = vpop.f32.mrb[0].mxu0
    %v2035 = vadd.f32 0.0, %v2034
    %v2036 = vpop.f32.mrb[0].mxu0
    %2037 = vdwg.mxu0
    %v2038 = vadd.f32 %v1960, %v2035
    %v2039 = vmul.f32 %v2038, %v186
    %v2040 = vtanh.pop %v2039
    %v2041 = vmul.f32 %v2040, 0.5
    %v2042 = vadd.f32 %v2041, 0.5
    %v2043 = vmul.f32 %v2042, %v1785
    %2045 = vrot.lane.b32.xlu0 %v2040, 64
    %v2046 = vpop.permute.xlu0 %2045
    %v2048 = vmul.f32 %v2042, %v2046
    %2050 = vrot.lane.b32.xlu0 %v2048, 32
    %v2051 = vpop.permute.xlu0 %2050
    %v2053 = vadd.f32 %v2043, %v2051
    %v2054 = vtanh.pop %v2053
    %2056 = vrot.lane.b32.xlu0 %v2054, 64
    %v2057 = vpop.permute.xlu0 %2056
    %v2059 = vmul.f32 %v2042, %v2057
    %2061 = vrot.lane.b32.xlu0 %v2059, 96
    %v2062 = vpop.permute.xlu0 %2061
    %2064 = vst.msk [vmem:[#allocation2 + $0x8] sm:$0xff] %vm995, %v2062
    %2065 = vmatprep.subr.mxu0 0.0
    %2066 = vmatpush1.msra.mxu0 %v86
    %2067 = vmatprep.subr.mxu0 0.0
    %2068 = vmatpush1.msra.mxu0 %v87
    %2069 = vmatprep.subr.mxu0 0.0
    %2070 = vmatpush1.msra.mxu0 %v88
    %2071 = vmatprep.subr.mxu0 0.0
    %2072 = vmatpush1.msra.mxu0 %v89
    %2073 = vmatprep.subr.mxu0 0.0
    %2074 = vmatpush1.msra.mxu0 0.0
    %2075 = vmatprep.subr.mxu0 0.0
    %2076 = vmatpush1.msra.mxu0 0.0
    %2077 = vmatprep.subr.mxu0 0.0
    %2078 = vmatpush1.msra.mxu0 0.0
    %2079 = vmatprep.subr.mxu0 0.0
    %2080 = vmatpush1.msra.mxu0 0.0
    %2081 = vmatprep.subr.mxu0 0.0
    %2082 = vmatpush1.msra.mxu0 0.0
    %2083 = vmatprep.subr.mxu0 0.0
    %2084 = vmatpush1.msra.mxu0 0.0
    %2085 = vmatprep.subr.mxu0 0.0
    %2086 = vmatpush1.msra.mxu0 0.0
    %2087 = vmatprep.subr.mxu0 0.0
    %2088 = vmatpush1.msra.mxu0 0.0
    %2089 = vmatprep.subr.mxu0 0.0
    %2090 = vmatpush1.msra.mxu0 0.0
    %2091 = vmatprep.subr.mxu0 0.0
    %2092 = vmatpush1.msra.mxu0 0.0
    %2093 = vmatprep.subr.mxu0 0.0
    %2094 = vmatpush1.msra.mxu0 0.0
    %2095 = vmatprep.subr.mxu0 0.0
    %2096 = vmatpush1.msra.mxu0 0.0
    %2097 = vmatprep.subr.mxu0 0.0
    %2098 = vmatpush1.msra.mxu0 0.0
    %2099 = vmatprep.subr.mxu0 0.0
    %2100 = vmatpush1.msra.mxu0 0.0
    %2101 = vmatprep.subr.mxu0 0.0
    %2102 = vmatpush1.msra.mxu0 0.0
    %2103 = vmatprep.subr.mxu0 0.0
    %2104 = vmatpush1.msra.mxu0 0.0
    %2105 = vmatprep.subr.mxu0 0.0
    %2106 = vmatpush1.msra.mxu0 0.0
    %2107 = vmatprep.subr.mxu0 0.0
    %2108 = vmatpush1.msra.mxu0 0.0
    %2109 = vmatprep.subr.mxu0 0.0
    %2110 = vmatpush1.msra.mxu0 0.0
    %2111 = vmatprep.subr.mxu0 0.0
    %2112 = vmatpush1.msra.mxu0 0.0
    %2113 = vmatprep.subr.mxu0 0.0
    %2114 = vmatpush1.msra.mxu0 0.0
    %2115 = vmatprep.subr.mxu0 0.0
    %2116 = vmatpush1.msra.mxu0 0.0
    %2117 = vmatprep.subr.mxu0 0.0
    %2118 = vmatpush1.msra.mxu0 0.0
    %2119 = vmatprep.subr.mxu0 0.0
    %2120 = vmatpush1.msra.mxu0 0.0
    %2121 = vmatprep.subr.mxu0 0.0
    %2122 = vmatpush1.msra.mxu0 0.0
    %2123 = vmatprep.subr.mxu0 0.0
    %2124 = vmatpush1.msra.mxu0 0.0
    %2125 = vmatprep.subr.mxu0 0.0
    %2126 = vmatpush1.msra.mxu0 0.0
    %2127 = vmatprep.subr.mxu0 0.0
    %2128 = vmatpush1.msra.mxu0 0.0
    %2129 = vmatprep.mubr.f32.mxu0 0.0
    %2130 = vmatmul.mubr.f32.gmra.mrb[0].mxu0 %v1966
    %v2131 = vpop.f32.mrb[0].mxu0
    %v2132 = vadd.f32 0.0, %v2131
    %v2133 = vpop.f32.mrb[0].mxu0
    %2134 = vdwg.mxu0
    %v2135 = vadd.f32 %v178, %v2132
    %v2136 = vmul.f32 %v2135, %v186
    %v2137 = vtanh.pop %v2136
    %v2138 = vmul.f32 %v2137, 0.5
    %v2139 = vadd.f32 %v2138, 0.5
    %v2140 = vmul.f32 %v2139, %v1882
    %2142 = vrot.lane.b32.xlu0 %v2137, 64
    %v2143 = vpop.permute.xlu0 %2142
    %v2145 = vmul.f32 %v2139, %v2143
    %2147 = vrot.lane.b32.xlu0 %v2145, 32
    %v2148 = vpop.permute.xlu0 %2147
    %v2150 = vadd.f32 %v2140, %v2148
    %v2151 = vtanh.pop %v2150
    %2153 = vrot.lane.b32.xlu0 %v2151, 64
    %v2154 = vpop.permute.xlu0 %2153
    %v2156 = vmul.f32 %v2139, %v2154
    %2157 = vrot.lane.b32.xlu0 %v2059, 32
    %v2158 = vpop.permute.xlu0 %2157
    %v2159 = vsel %vm187, %v2158, 0
    %2161 = vmatprep.subr.mxu0 0.0
    %2162 = vmatpush1.msra.mxu0 %v95
    %2163 = vmatprep.subr.mxu0 0.0
    %2164 = vmatpush1.msra.mxu0 %v96
    %2165 = vmatprep.subr.mxu0 0.0
    %2166 = vmatpush1.msra.mxu0 %v97
    %2167 = vmatprep.subr.mxu0 0.0
    %2168 = vmatpush1.msra.mxu0 %v98
    %2169 = vmatprep.subr.mxu0 0.0
    %2170 = vmatpush1.msra.mxu0 0.0
    %2171 = vmatprep.subr.mxu0 0.0
    %2172 = vmatpush1.msra.mxu0 0.0
    %2173 = vmatprep.subr.mxu0 0.0
    %2174 = vmatpush1.msra.mxu0 0.0
    %2175 = vmatprep.subr.mxu0 0.0
    %2176 = vmatpush1.msra.mxu0 0.0
    %2177 = vmatprep.subr.mxu0 0.0
    %2178 = vmatpush1.msra.mxu0 0.0
    %2179 = vmatprep.subr.mxu0 0.0
    %2180 = vmatpush1.msra.mxu0 0.0
    %2181 = vmatprep.subr.mxu0 0.0
    %2182 = vmatpush1.msra.mxu0 0.0
    %2183 = vmatprep.subr.mxu0 0.0
    %2184 = vmatpush1.msra.mxu0 0.0
    %2185 = vmatprep.subr.mxu0 0.0
    %2186 = vmatpush1.msra.mxu0 0.0
    %2187 = vmatprep.subr.mxu0 0.0
    %2188 = vmatpush1.msra.mxu0 0.0
    %2189 = vmatprep.subr.mxu0 0.0
    %2190 = vmatpush1.msra.mxu0 0.0
    %2191 = vmatprep.subr.mxu0 0.0
    %2192 = vmatpush1.msra.mxu0 0.0
    %2193 = vmatprep.subr.mxu0 0.0
    %2194 = vmatpush1.msra.mxu0 0.0
    %2195 = vmatprep.subr.mxu0 0.0
    %2196 = vmatpush1.msra.mxu0 0.0
    %2197 = vmatprep.subr.mxu0 0.0
    %2198 = vmatpush1.msra.mxu0 0.0
    %2199 = vmatprep.subr.mxu0 0.0
    %2200 = vmatpush1.msra.mxu0 0.0
    %2201 = vmatprep.subr.mxu0 0.0
    %2202 = vmatpush1.msra.mxu0 0.0
    %2203 = vmatprep.subr.mxu0 0.0
    %2204 = vmatpush1.msra.mxu0 0.0
    %2205 = vmatprep.subr.mxu0 0.0
    %2206 = vmatpush1.msra.mxu0 0.0
    %2207 = vmatprep.subr.mxu0 0.0
    %2208 = vmatpush1.msra.mxu0 0.0
    %2209 = vmatprep.subr.mxu0 0.0
    %2210 = vmatpush1.msra.mxu0 0.0
    %2211 = vmatprep.subr.mxu0 0.0
    %2212 = vmatpush1.msra.mxu0 0.0
    %2213 = vmatprep.subr.mxu0 0.0
    %2214 = vmatpush1.msra.mxu0 0.0
    %2215 = vmatprep.subr.mxu0 0.0
    %2216 = vmatpush1.msra.mxu0 0.0
    %2217 = vmatprep.subr.mxu0 0.0
    %2218 = vmatpush1.msra.mxu0 0.0
    %2219 = vmatprep.subr.mxu0 0.0
    %2220 = vmatpush1.msra.mxu0 0.0
    %2221 = vmatprep.subr.mxu0 0.0
    %2222 = vmatpush1.msra.mxu0 0.0
    %2223 = vmatprep.subr.mxu0 0.0
    %2224 = vmatpush1.msra.mxu0 0.0
    %2225 = vmatprep.mubr.f32.mxu0 0.0
    %2226 = vmatmul.mubr.f32.gmra.mrb[0].mxu0 %v2159
    %v2227 = vpop.f32.mrb[0].mxu0
    %v2228 = vadd.f32 %v287, %v2227
    %v2229 = vpop.f32.mrb[0].mxu0
    %2230 = vdwg.mxu0
    %2232 = vrot.lane.b32.xlu0 %v2156, 32
    %v2233 = vpop.permute.xlu0 %2232
    %v2234 = vsel %vm187, %v2233, 0
    %2236 = vmatprep.subr.mxu0 0.0
    %2237 = vmatpush1.msra.mxu0 %v91
    %2238 = vmatprep.subr.mxu0 0.0
    %2239 = vmatpush1.msra.mxu0 %v92
    %2240 = vmatprep.subr.mxu0 0.0
    %2241 = vmatpush1.msra.mxu0 %v93
    %2242 = vmatprep.subr.mxu0 0.0
    %2243 = vmatpush1.msra.mxu0 %v94
    %2244 = vmatprep.subr.mxu0 0.0
    %2245 = vmatpush1.msra.mxu0 0.0
    %2246 = vmatprep.subr.mxu0 0.0
    %2247 = vmatpush1.msra.mxu0 0.0
    %2248 = vmatprep.subr.mxu0 0.0
    %2249 = vmatpush1.msra.mxu0 0.0
    %2250 = vmatprep.subr.mxu0 0.0
    %2251 = vmatpush1.msra.mxu0 0.0
    %2252 = vmatprep.subr.mxu0 0.0
    %2253 = vmatpush1.msra.mxu0 0.0
    %2254 = vmatprep.subr.mxu0 0.0
    %2255 = vmatpush1.msra.mxu0 0.0
    %2256 = vmatprep.subr.mxu0 0.0
    %2257 = vmatpush1.msra.mxu0 0.0
    %2258 = vmatprep.subr.mxu0 0.0
    %2259 = vmatpush1.msra.mxu0 0.0
    %2260 = vmatprep.subr.mxu0 0.0
    %2261 = vmatpush1.msra.mxu0 0.0
    %2262 = vmatprep.subr.mxu0 0.0
    %2263 = vmatpush1.msra.mxu0 0.0
    %2264 = vmatprep.subr.mxu0 0.0
    %2265 = vmatpush1.msra.mxu0 0.0
    %2266 = vmatprep.subr.mxu0 0.0
    %2267 = vmatpush1.msra.mxu0 0.0
    %2268 = vmatprep.subr.mxu0 0.0
    %2269 = vmatpush1.msra.mxu0 0.0
    %2270 = vmatprep.subr.mxu0 0.0
    %2271 = vmatpush1.msra.mxu0 0.0
    %2272 = vmatprep.subr.mxu0 0.0
    %2273 = vmatpush1.msra.mxu0 0.0
    %2274 = vmatprep.subr.mxu0 0.0
    %2275 = vmatpush1.msra.mxu0 0.0
    %2276 = vmatprep.subr.mxu0 0.0
    %2277 = vmatpush1.msra.mxu0 0.0
    %2278 = vmatprep.subr.mxu0 0.0
    %2279 = vmatpush1.msra.mxu0 0.0
    %2280 = vmatprep.subr.mxu0 0.0
    %2281 = vmatpush1.msra.mxu0 0.0
    %2282 = vmatprep.subr.mxu0 0.0
    %2283 = vmatpush1.msra.mxu0 0.0
    %2284 = vmatprep.subr.mxu0 0.0
    %2285 = vmatpush1.msra.mxu0 0.0
    %2286 = vmatprep.subr.mxu0 0.0
    %2287 = vmatpush1.msra.mxu0 0.0
    %2288 = vmatprep.subr.mxu0 0.0
    %2289 = vmatpush1.msra.mxu0 0.0
    %2290 = vmatprep.subr.mxu0 0.0
    %2291 = vmatpush1.msra.mxu0 0.0
    %2292 = vmatprep.subr.mxu0 0.0
    %2293 = vmatpush1.msra.mxu0 0.0
    %2294 = vmatprep.subr.mxu0 0.0
    %2295 = vmatpush1.msra.mxu0 0.0
    %2296 = vmatprep.subr.mxu0 0.0
    %2297 = vmatpush1.msra.mxu0 0.0
    %2298 = vmatprep.subr.mxu0 0.0
    %2299 = vmatpush1.msra.mxu0 0.0
    %2300 = vmatprep.mubr.f32.mxu0 0.0
    %2301 = vmatmul.mubr.f32.gmra.mrb[0].mxu0 %v2234
    %v2302 = vpop.f32.mrb[0].mxu0
    %v2303 = vadd.f32 0.0, %v2302
    %v2304 = vpop.f32.mrb[0].mxu0
    %2305 = vdwg.mxu0
    %v2306 = vadd.f32 %v2228, %v2303
    %v2307 = vmul.f32 %v2306, %v186
    %v2308 = vtanh.pop %v2307
    %v2309 = vmul.f32 %v2308, 0.5
    %v2310 = vadd.f32 %v2309, 0.5
    %v2311 = vmul.f32 %v2310, %v2053
    %2313 = vrot.lane.b32.xlu0 %v2308, 64
    %v2314 = vpop.permute.xlu0 %2313
    %v2316 = vmul.f32 %v2310, %v2314
    %2318 = vrot.lane.b32.xlu0 %v2316, 32
    %v2319 = vpop.permute.xlu0 %2318
    %v2321 = vadd.f32 %v2311, %v2319
    %v2322 = vtanh.pop %v2321
    %2324 = vrot.lane.b32.xlu0 %v2322, 64
    %v2325 = vpop.permute.xlu0 %2324
    %v2327 = vmul.f32 %v2310, %v2325
    %2328 = vst.msk [vmem:[#allocation2 + $0x8] sm:$0xff] %vm1260, %v2327
    %v2329 = vld [vmem:[#allocation2] sm:$0xff]
    %v2330 = vld [vmem:[#allocation2 + $0x8] sm:$0xff]
    %v2331 = vld [vmem:[#allocation8] sm:$0xff]
    %v2332 = vld [vmem:[#allocation8 + $0x8] sm:$0xff]
    %v2333 = vld [vmem:[#allocation8 + $0x10] sm:$0xff]
    %v2334 = vld [vmem:[#allocation8 + $0x18] sm:$0xff]
    %v2335 = vld [vmem:[#allocation8 + $0x20] sm:$0xff]
    %v2336 = vld [vmem:[#allocation8 + $0x28] sm:$0xff]
    %v2337 = vld [vmem:[#allocation8 + $0x30] sm:$0xff]
    %v2338 = vld [vmem:[#allocation8 + $0x38] sm:$0xff]
    %v2339 = vld [vmem:[#allocation8 + $0x40] sm:$0xff]
    %v2340 = vld [vmem:[#allocation8 + $0x48] sm:$0xff]
    %v2341 = vld [vmem:[#allocation8 + $0x50] sm:$0xff]
    %v2342 = vld [vmem:[#allocation8 + $0x58] sm:$0xff]
    %v2343 = vld [vmem:[#allocation8 + $0x60] sm:$0xff]
    %v2344 = vld [vmem:[#allocation8 + $0x68] sm:$0xff]
    %v2345 = vld [vmem:[#allocation8 + $0x70] sm:$0xff]
    %v2346 = vld [vmem:[#allocation8 + $0x78] sm:$0xff]
    %v2347 = vld [vmem:[#allocation8 + $0x80] sm:$0xff]
    %v2348 = vld [vmem:[#allocation8 + $0x88] sm:$0xff]
    %v2349 = vld [vmem:[#allocation8 + $0x90] sm:$0xff]
    %v2350 = vld [vmem:[#allocation8 + $0x98] sm:$0xff]
    %v2351 = vld [vmem:[#allocation8 + $0xa0] sm:$0xff]
    %v2352 = vld [vmem:[#allocation8 + $0xa8] sm:$0xff]
    %v2353 = vld [vmem:[#allocation8 + $0xb0] sm:$0xff]
    %v2354 = vld [vmem:[#allocation8 + $0xb8] sm:$0xff]
    %v2355 = vld [vmem:[#allocation8 + $0xc0] sm:$0xff]
    %v2356 = vld [vmem:[#allocation8 + $0xc8] sm:$0xff]
    %v2357 = vld [vmem:[#allocation8 + $0xd0] sm:$0xff]
    %v2358 = vld [vmem:[#allocation8 + $0xd8] sm:$0xff]
    %v2359 = vld [vmem:[#allocation8 + $0xe0] sm:$0xff]
    %v2360 = vld [vmem:[#allocation8 + $0xe8] sm:$0xff]
    %v2361 = vld [vmem:[#allocation8 + $0xf0] sm:$0xff]
    %v2362 = vld [vmem:[#allocation8 + $0xf8] sm:$0xff]
    %v2363 = vld [vmem:[%s8] sm:$0x1]
    %v2365 = vlaneseq
    %v2366 = vshrl.u32 %v2365, 7
    %v2367 = vsub.s32 0, %v2366
    %v2368 = vrot.slane %v2363, %v2367
    %2370 = vmatprep.subr.mxu0 0.0
    %2371 = vmatpush1.msra.mxu0 %v2331
    %2372 = vmatprep.subr.mxu0 0.0
    %2373 = vmatpush1.msra.mxu0 %v2332
    %2374 = vmatprep.subr.mxu0 0.0
    %2375 = vmatpush1.msra.mxu0 %v2333
    %2376 = vmatprep.subr.mxu0 0.0
    %2377 = vmatpush1.msra.mxu0 %v2334
    %2378 = vmatprep.subr.mxu0 0.0
    %2379 = vmatpush1.msra.mxu0 %v2335
    %2380 = vmatprep.subr.mxu0 0.0
    %2381 = vmatpush1.msra.mxu0 %v2336
    %2382 = vmatprep.subr.mxu0 0.0
    %2383 = vmatpush1.msra.mxu0 %v2337
    %2384 = vmatprep.subr.mxu0 0.0
    %2385 = vmatpush1.msra.mxu0 %v2338
    %2386 = vmatprep.subr.mxu0 0.0
    %2387 = vmatpush1.msra.mxu0 %v2339
    %2388 = vmatprep.subr.mxu0 0.0
    %2389 = vmatpush1.msra.mxu0 %v2340
    %2390 = vmatprep.subr.mxu0 0.0
    %2391 = vmatpush1.msra.mxu0 %v2341
    %2392 = vmatprep.subr.mxu0 0.0
    %2393 = vmatpush1.msra.mxu0 %v2342
    %2394 = vmatprep.subr.mxu0 0.0
    %2395 = vmatpush1.msra.mxu0 %v2343
    %2396 = vmatprep.subr.mxu0 0.0
    %2397 = vmatpush1.msra.mxu0 %v2344
    %2398 = vmatprep.subr.mxu0 0.0
    %2399 = vmatpush1.msra.mxu0 %v2345
    %2400 = vmatprep.subr.mxu0 0.0
    %2401 = vmatpush1.msra.mxu0 %v2346
    %2402 = vmatprep.subr.mxu0 0.0
    %2403 = vmatpush1.msra.mxu0 %v2347
    %2404 = vmatprep.subr.mxu0 0.0
    %2405 = vmatpush1.msra.mxu0 %v2348
    %2406 = vmatprep.subr.mxu0 0.0
    %2407 = vmatpush1.msra.mxu0 %v2349
    %2408 = vmatprep.subr.mxu0 0.0
    %2409 = vmatpush1.msra.mxu0 %v2350
    %2410 = vmatprep.subr.mxu0 0.0
    %2411 = vmatpush1.msra.mxu0 %v2351
    %2412 = vmatprep.subr.mxu0 0.0
    %2413 = vmatpush1.msra.mxu0 %v2352
    %2414 = vmatprep.subr.mxu0 0.0
    %2415 = vmatpush1.msra.mxu0 %v2353
    %2416 = vmatprep.subr.mxu0 0.0
    %2417 = vmatpush1.msra.mxu0 %v2354
    %2418 = vmatprep.subr.mxu0 0.0
    %2419 = vmatpush1.msra.mxu0 %v2355
    %2420 = vmatprep.subr.mxu0 0.0
    %2421 = vmatpush1.msra.mxu0 %v2356
    %2422 = vmatprep.subr.mxu0 0.0
    %2423 = vmatpush1.msra.mxu0 %v2357
    %2424 = vmatprep.subr.mxu0 0.0
    %2425 = vmatpush1.msra.mxu0 %v2358
    %2426 = vmatprep.subr.mxu0 0.0
    %2427 = vmatpush1.msra.mxu0 %v2359
    %2428 = vmatprep.subr.mxu0 0.0
    %2429 = vmatpush1.msra.mxu0 %v2360
    %2430 = vmatprep.subr.mxu0 0.0
    %2431 = vmatpush1.msra.mxu0 %v2361
    %2432 = vmatprep.subr.mxu0 0.0
    %2433 = vmatpush1.msra.mxu0 %v2362
    %2434 = vmatprep.mubr.f32.mxu0 %v2330
    %2435 = vmatmul.mubr.f32.gmra.mrb[0].mxu0 %v2329
    %v2436 = vpop.f32.mrb[0].mxu0
    %v2437 = vadd.f32 %v2368, %v2436
    %v2438 = vpop.f32.mrb[0].mxu0
    %2439 = vdwg.mxu0
    %2440 = vst.msk [vmem:[%s9] sm:$0xff] %vm187, %v2437
    // Predicated region
    $region54: #{forward.1} parent=1 // pred_check
      _
    $region55: #{forward.1} parent=1 // pred_check_branch
      %2442 = sbr.rel (0) target = $region57
    $region56: #{forward.1} parent=1 // pred_region
      _
    $region57: #{forward.1} parent=1 // pred_fallthru
      _
    // Predicated region
    $region58: #{forward.1} parent=1 // pred_check
      _
    $region59: #{forward.1} parent=1 // pred_check_branch
      %2444 = sbr.rel (0) target = $region61
    $region60: #{forward.1} parent=1 // pred_region
      _
    $region61: #{forward.1} parent=1 // pred_fallthru
      _
    %2445 = vsyncpa [#allocation4], 1
    %2446 = vsyncpa [#allocation6], 1
    %2447 = vsyncpa [#allocation9], 1

</llo_original>
